<compile_context>
chip_gen: v6e
topology: v6e:2x2x1
jax: 0.10.0
libtpu: 0.0.40
codegen_flags: <defaults>
</compile_context>

<pallas_src>
import jax
import jax.numpy as jnp
from jax import lax
from jax.experimental import pallas as pl
from jax.experimental.pallas import tpu as pltpu


_LANE = 128
_VMEM_BUDGET = 20 * 1024 * 1024   # conservative double-buffered footprint target
_VMEM_LIMIT = 32 * 1024 * 1024    # raise v5e's 16 MiB scoped default; == v6e/v7x default


def _round_up(x, m):
    return ((x + m - 1) // m) * m


def _divisor_tiles(n, candidates):
    return [t for t in candidates if t <= n and n % t == 0]


# ----------------------------------------------------------------------------
# Kernel A (tiny, one step): delta = pooled_H @ W       [K, F_out_pad] f32
# ----------------------------------------------------------------------------
def pooled_delta_kernel(pooled_ref, w_ref, delta_ref):
    delta_ref[...] = jnp.dot(pooled_ref[...], w_ref[...],
                             preferred_element_type=jnp.float32)


# ----------------------------------------------------------------------------
# Kernel B: XW = H_old @ W  (+ scatter-add of delta rows landing in this tile)
#   idx_ref    : SMEM [K]            (scalar prefetch, sorted)
#   bounds_ref : SMEM [n_tiles + 1]  (scalar prefetch, searchsorted boundaries)
#   hold_ref   : VMEM [tm, F_in]  f32 ; w_ref: [F_in, F_out_pad] bf16
#   delta_ref  : VMEM [K, F_out_pad] f32 ; xw_ref: [tm, F_out_pad] bf16
# ----------------------------------------------------------------------------
def unpool_xw_kernel(idx_ref, bounds_ref, hold_ref, w_ref, delta_ref,
                     xw_ref, acc_ref):
    i = pl.program_id(0)
    tm = hold_ref.shape[0]
    row_start = i * tm

    # Streaming matmul: bf16 MXU operands, f32 accumulation.
    acc_ref[...] = jnp.dot(hold_ref[...].astype(jnp.bfloat16), w_ref[...],
                           preferred_element_type=jnp.float32)

    # Only the pooled rows whose (sorted) index falls in this row tile.
    start = bounds_ref[i]
    end = bounds_ref[i + 1]

    def scatter_add(j, carry):
        r = idx_ref[j] - row_start           # guaranteed in [0, tm)
        row = acc_ref[pl.ds(r, 1), :]
        acc_ref[pl.ds(r, 1), :] = row + delta_ref[pl.ds(j, 1), :]
        return carry

    lax.fori_loop(start, end, scatter_add, 0)

    xw_ref[...] = acc_ref[...].astype(xw_ref.dtype)


# ----------------------------------------------------------------------------
# Kernel C: H_out = relu(A @ XW)   — (row, k)-tiled, f32 A cast in-kernel
# ----------------------------------------------------------------------------
def a_xw_relu_kernel(a_ref, xw_ref, o_ref, acc_ref):
    @pl.when(pl.program_id(1) == 0)
    def _():
        acc_ref[...] = jnp.zeros_like(acc_ref)

    acc_ref[...] += jnp.dot(a_ref[...].astype(jnp.bfloat16), xw_ref[...],
                            preferred_element_type=jnp.float32)

    @pl.when(pl.program_id(1) == pl.num_programs(1) - 1)
    def _():
        o_ref[...] = jnp.maximum(acc_ref[...], 0.0).astype(o_ref.dtype)


# ----------------------------------------------------------------------------
# Tile pickers (VMEM-budgeted; keep >= 2 row programs for v7x megacore)
# ----------------------------------------------------------------------------
def _pick_xw_row_tile(n_pad, f_in, f_out_pad, k_pooled, budget=_VMEM_BUDGET):
    cands = _divisor_tiles(n_pad, (1024, 512, 256, 128, 64, 32, 16, 8))
    multi = [t for t in cands if n_pad // t >= 2]
    cands = multi if multi else cands
    fixed = 2 * f_in * f_out_pad * 2 + 2 * k_pooled * f_out_pad * 4
    for tm in cands:
        fp = fixed + 2 * tm * f_in * 4 + 2 * tm * f_out_pad * 2 + tm * f_out_pad * 4
        if fp <= budget:
            return tm
    return cands[-1] if cands else n_pad


def _pick_axw_tiles(n_pad, f_out_pad, out_bytes, budget=_VMEM_BUDGET):
    row_cands = _divisor_tiles(n_pad, (1024, 512, 256, 128, 64, 32, 16, 8))
    multi = [t for t in row_cands if n_pad // t >= 2]
    row_cands = multi if multi else row_cands
    k_cands = _divisor_tiles(n_pad, (2048, 1024, 512, 256, 128))
    if not k_cands:
        k_cands = [n_pad]
    for tm in row_cands:
        for tk in k_cands:
            fp = (2 * tm * tk * 4 + 2 * tk * f_out_pad * 2
                  + 2 * tm * f_out_pad * out_bytes + tm * f_out_pad * 4)
            if fp <= budget:
                return tm, tk
    return row_cands[-1], k_cands[-1]


# ----------------------------------------------------------------------------
# Wrapper: matches GUnpoolBlock.forward -> (H_out, A_old)
# ----------------------------------------------------------------------------
def gunpool_block_forward(pooled_H, H_old, A_old, idx, weight):
    n_nodes = A_old.shape[0]
    k_pooled, f_in = pooled_H.shape
    f_out = weight.shape[1]
    out_dtype = pooled_H.dtype
    out_bytes = jnp.dtype(out_dtype).itemsize

    # ---- layout: lane-dense output + tileable node count --------------------
    f_out_pad = _round_up(f_out, _LANE)
    n_pad = _round_up(n_nodes, _LANE)

    w_bf16 = weight.astype(jnp.bfloat16)          # one-time cast; W is re-read per step
    if f_out_pad != f_out:
        w_bf16 = jnp.pad(w_bf16, ((0, 0), (0, f_out_pad - f_out)))

    h_old_f32 = H_old.astype(jnp.float32)
    a_f32 = A_old.astype(jnp.float32)             # f32 in HBM; bf16 cast happens in-kernel
    if n_pad != n_nodes:
        # TODO(synk): ragged-N path costs one extra HBM pass over A (zero pad).
        h_old_f32 = jnp.pad(h_old_f32, ((0, n_pad - n_nodes), (0, 0)))
        a_f32 = jnp.pad(a_f32, ((0, n_pad - n_nodes), (0, n_pad - n_nodes)))

    # Sort idx so every row tile owns a contiguous [start, end) range of pooled rows.
    # TODO(synk): duplicate indices would become a sum (torch is last-write-wins);
    # unpooling indices are unique, so semantics match.
    idx_i32 = idx.astype(jnp.int32)
    order = jnp.argsort(idx_i32)
    idx_sorted = idx_i32[order]
    pooled_sorted = pooled_H.astype(jnp.bfloat16)[order]

    # ---- kernel A: delta = pooled_H @ W (tiny, single step) -----------------
    delta = pl.pallas_call(
        pooled_delta_kernel,
        out_shape=jax.ShapeDtypeStruct((k_pooled, f_out_pad), jnp.float32),
        grid=(1,),
        in_specs=[pl.BlockSpec((k_pooled, f_in), lambda i: (0, 0)),
                  pl.BlockSpec((f_in, f_out_pad), lambda i: (0, 0))],
        out_specs=pl.BlockSpec((k_pooled, f_out_pad), lambda i: (0, 0)),
    )(pooled_sorted, w_bf16)

    # ---- kernel B: XW = H_old @ W + scatter(delta, idx), row-tiled ----------
    tm1 = _pick_xw_row_tile(n_pad, f_in, f_out_pad, k_pooled)
    n_row_tiles = n_pad // tm1
    tile_bounds = jnp.searchsorted(
        idx_sorted, jnp.arange(n_row_tiles + 1, dtype=jnp.int32) * tm1,
        side="left").astype(jnp.int32)

    xw = pl.pallas_call(
        unpool_xw_kernel,
        out_shape=jax.ShapeDtypeStruct((n_pad, f_out_pad), jnp.bfloat16),
        grid_spec=pltpu.PrefetchScalarGridSpec(
            num_scalar_prefetch=2,
            grid=(n_row_tiles,),
            in_specs=[
                pl.BlockSpec((tm1, f_in), lambda i, idx_r, bnd_r: (i, 0)),
                pl.BlockSpec((f_in, f_out_pad), lambda i, idx_r, bnd_r: (0, 0)),
                pl.BlockSpec((k_pooled, f_out_pad), lambda i, idx_r, bnd_r: (0, 0)),
            ],
            out_specs=pl.BlockSpec((tm1, f_out_pad), lambda i, idx_r, bnd_r: (i, 0)),
            scratch_shapes=[pltpu.VMEM((tm1, f_out_pad), jnp.float32)],
        ),
        compiler_params=pltpu.CompilerParams(
            dimension_semantics=("parallel",),
            vmem_limit_bytes=_VMEM_LIMIT),
    )(idx_sorted, tile_bounds, h_old_f32, w_bf16, delta)

    # ---- kernel C: H_out = relu(A @ XW), (row, k)-tiled ----------------------
    tm, tk = _pick_axw_tiles(n_pad, f_out_pad, out_bytes)
    cost = pl.CostEstimate(
        flops=2 * n_pad * n_pad * f_out_pad,
        transcendentals=0,
        bytes_accessed=(n_pad * n_pad * 4
                        + (n_pad // tm) * n_pad * f_out_pad * 2
                        + n_pad * f_out_pad * out_bytes),
    )

    h_out_pad = pl.pallas_call(
        a_xw_relu_kernel,
        out_shape=jax.ShapeDtypeStruct((n_pad, f_out_pad), out_dtype),
        grid_spec=pltpu.PrefetchScalarGridSpec(
            num_scalar_prefetch=0,
            grid=(n_pad // tm, n_pad // tk),
            in_specs=[
                pl.BlockSpec((tm, tk), lambda i, k: (i, k)),
                pl.BlockSpec((tk, f_out_pad), lambda i, k: (k, 0)),
            ],
            out_specs=pl.BlockSpec((tm, f_out_pad), lambda i, k: (i, 0)),
            scratch_shapes=[pltpu.VMEM((tm, f_out_pad), jnp.float32)],
        ),
        compiler_params=pltpu.CompilerParams(
            dimension_semantics=("parallel", "arbitrary"),
            vmem_limit_bytes=_VMEM_LIMIT),
        cost_estimate=cost,
    )(a_f32, xw)

    h_out = h_out_pad[:n_nodes, :f_out]
    return h_out, A_old


if __name__ == "__main__":
    key = jax.random.PRNGKey(0)

    # Small-but-tileable shapes consistent with the module's forward.
    N = 512      # original (unpooled) number of nodes -> A_old is [N, N]
    K = 128      # number of pooled nodes kept by the earlier pooling stage
    F_IN = 256   # in_features
    F_OUT = 128  # out_features (multiple of 128 -> lane-dense, no padding)
    # TODO(synk): training-mode dropout (p > 0) not implemented; identity used.

    k1, k2, k3, k4, k5 = jax.random.split(key, 5)
    pooled_H = jax.random.normal(k1, (K, F_IN), dtype=jnp.float32)
    H_old = jax.random.normal(k2, (N, F_IN), dtype=jnp.float32)
    A_old = jax.random.uniform(k3, (N, N), dtype=jnp.float32)
    idx = jnp.sort(jax.random.permutation(k4, N)[:K]).astype(jnp.int32)

    # Deterministic Xavier-uniform init for GCNLayer.weight [F_IN, F_OUT]
    bound = (6.0 / (F_IN + F_OUT)) ** 0.5
    weight = jax.random.uniform(k5, (F_IN, F_OUT),
                                minval=-bound, maxval=bound, dtype=jnp.float32)

    fwd = jax.jit(gunpool_block_forward)
    H_out, A_out = fwd(pooled_H, H_old, A_old, idx, weight)
    H_out = jax.block_until_ready(H_out)

    # Pure-JAX reference (f32) for correctness; kernel uses bf16 MXU operands,
    # so compare with a bf16-appropriate normalized tolerance.
    h_full = jnp.zeros((N, F_IN), jnp.float32).at[idx].set(pooled_H)
    ref = jnp.maximum((A_old @ (h_full + H_old)) @ weight, 0.0)

    assert H_out.shape == (N, F_OUT)
    rel_err = float(jnp.max(jnp.abs(H_out - ref)) / (jnp.max(jnp.abs(ref)) + 1e-6))
    assert rel_err < 3e-2, f"mismatch vs reference: rel_err={rel_err}"
    assert bool(jnp.array_equal(A_out, A_old))

    print("KERNEL_OK")
</pallas_src>

<mosaic_0001>
module attributes {stable_mosaic.version = 11 : i64} {
  func.func @pooled_delta_kernel(%arg0: i32, %arg1: memref<128x256xbf16, #tpu.memory_space<vmem>>, %arg2: memref<256x128xbf16, #tpu.memory_space<vmem>>, %arg3: memref<128x128xf32, #tpu.memory_space<vmem>>) attributes {dimension_semantics = [#tpu.dimension_semantics<arbitrary>], iteration_bounds = array<i64: 1>, scalar_prefetch = 0 : i64, scratch_operands = 0 : i64, tpu.core_type = #tpu.core_type<tc>, window_params = [{pipeline_mode = #tpu.pipeline_mode<synchronous>, transform_indices = @transform_0, window_bounds = array<i64: 128, 256>}, {pipeline_mode = #tpu.pipeline_mode<synchronous>, transform_indices = @transform_1, window_bounds = array<i64: 256, 128>}, {pipeline_mode = #tpu.pipeline_mode<synchronous>, transform_indices = @transform_2, window_bounds = array<i64: 128, 128>}]} {
    %c0 = arith.constant 0 : index
    %c0_0 = arith.constant 0 : index
    %0 = vector.load %arg1[%c0, %c0_0] : memref<128x256xbf16, #tpu.memory_space<vmem>>, vector<128x256xbf16>
    %c0_1 = arith.constant 0 : index
    %c0_2 = arith.constant 0 : index
    %1 = vector.load %arg2[%c0_1, %c0_2] : memref<256x128xbf16, #tpu.memory_space<vmem>>, vector<256x128xbf16>
    %cst = arith.constant dense<0.000000e+00> : vector<128x128xf32>
    %2 = tpu.matmul %0, %1, %cst {dimension_numbers = #tpu.dot_dimension_numbers<[1], [0], [0], [1], [0, 0, 1, 1], [], []>} : vector<128x256xbf16>, vector<256x128xbf16>, vector<128x128xf32> -> vector<128x128xf32>
    %c0_3 = arith.constant 0 : index
    %c0_4 = arith.constant 0 : index
    %3 = vector.load %arg3[%c0_3, %c0_4] : memref<128x128xf32, #tpu.memory_space<vmem>>, vector<128x128xf32>
    tpu.vector_store %arg3[%c0_3, %c0_4], %2 {strides = array<i32>} : memref<128x128xf32, #tpu.memory_space<vmem>>, vector<128x128xf32>,
    return
  }
  func.func @transform_0(%arg0: i32) -> (i32, i32) {
    %c0_i32 = arith.constant 0 : i32
    %c0_i32_0 = arith.constant 0 : i32
    %c0_i32_1 = arith.constant 0 : i32
    return %c0_i32, %c0_i32_0 : i32, i32
  }
  func.func @transform_1(%arg0: i32) -> (i32, i32) {
    %c0_i32 = arith.constant 0 : i32
    %c0_i32_0 = arith.constant 0 : i32
    %c0_i32_1 = arith.constant 0 : i32
    return %c0_i32, %c0_i32_0 : i32, i32
  }
  func.func @transform_2(%arg0: i32) -> (i32, i32) {
    %c0_i32 = arith.constant 0 : i32
    %c0_i32_0 = arith.constant 0 : i32
    %c0_i32_1 = arith.constant 0 : i32
    return %c0_i32, %c0_i32_0 : i32, i32
  }
}

module attributes {stable_mosaic.version = 11 : i64} {
  func.func @unpool_xw_kernel(%arg0: i32, %arg1: memref<128xi32, #tpu.memory_space<smem>>, %arg2: memref<3xi32, #tpu.memory_space<smem>>, %arg3: memref<256x256xf32, #tpu.memory_space<vmem>>, %arg4: memref<256x128xbf16, #tpu.memory_space<vmem>>, %arg5: memref<128x128xf32, #tpu.memory_space<vmem>>, %arg6: memref<256x128xbf16, #tpu.memory_space<vmem>>, %arg7: memref<256x128xf32, #tpu.memory_space<vmem>>) attributes {dimension_semantics = [#tpu.dimension_semantics<parallel>], iteration_bounds = array<i64: 2>, scalar_prefetch = 2 : i64, scratch_operands = 1 : i64, tpu.core_type = #tpu.core_type<tc>, window_params = [{transform_indices = @transform_0, window_bounds = array<i64: 256, 256>}, {pipeline_mode = #tpu.pipeline_mode<synchronous>, transform_indices = @transform_1, window_bounds = array<i64: 256, 128>}, {pipeline_mode = #tpu.pipeline_mode<synchronous>, transform_indices = @transform_2, window_bounds = array<i64: 128, 128>}, {transform_indices = @transform_3, window_bounds = array<i64: 256, 128>}]} {
    %c256_i32 = arith.constant 256 : i32
    %0 = arith.muli %arg0, %c256_i32 : i32
    %c0 = arith.constant 0 : index
    %c0_0 = arith.constant 0 : index
    %1 = vector.load %arg3[%c0, %c0_0] : memref<256x256xf32, #tpu.memory_space<vmem>>, vector<256x256xf32>
    %2 = arith.truncf %1 : vector<256x256xf32> to vector<256x256xbf16>
    %c0_1 = arith.constant 0 : index
    %c0_2 = arith.constant 0 : index
    %3 = vector.load %arg4[%c0_1, %c0_2] : memref<256x128xbf16, #tpu.memory_space<vmem>>, vector<256x128xbf16>
    %cst = arith.constant dense<0.000000e+00> : vector<256x128xf32>
    %4 = tpu.matmul %2, %3, %cst {dimension_numbers = #tpu.dot_dimension_numbers<[1], [0], [0], [1], [0, 0, 1, 1], [], []>} : vector<256x256xbf16>, vector<256x128xbf16>, vector<256x128xf32> -> vector<256x128xf32>
    %c0_3 = arith.constant 0 : index
    %c0_4 = arith.constant 0 : index
    %5 = vector.load %arg7[%c0_3, %c0_4] : memref<256x128xf32, #tpu.memory_space<vmem>>, vector<256x128xf32>
    tpu.vector_store %arg7[%c0_3, %c0_4], %4 {strides = array<i32>} : memref<256x128xf32, #tpu.memory_space<vmem>>, vector<256x128xf32>,
    %6 = arith.index_cast %arg0 : i32 to index
    %7 = memref.load %arg2[%6] : memref<3xi32, #tpu.memory_space<smem>>
    %c1_i32 = arith.constant 1 : i32
    %8 = arith.addi %arg0, %c1_i32 : i32
    %9 = arith.index_cast %8 : i32 to index
    %10 = memref.load %arg2[%9] : memref<3xi32, #tpu.memory_space<smem>>
    %c0_i32 = arith.constant 0 : i32
    %11 = arith.subi %10, %7 : i32
    %12 = arith.addi %7, %11 : i32
    %c1_i32_5 = arith.constant 1 : i32
    scf.for %arg8 = %7 to %12 step %c1_i32_5  : i32 {
      %16 = arith.index_cast %arg8 : i32 to index
      %17 = memref.load %arg1[%16] : memref<128xi32, #tpu.memory_space<smem>>
      %18 = arith.subi %17, %0 : i32
      %19 = arith.index_cast %18 : i32 to index
      %c0_10 = arith.constant 0 : index
      %20 = vector.load %arg7[%19, %c0_10] : memref<256x128xf32, #tpu.memory_space<vmem>>, vector<1x128xf32>
      %21 = arith.index_cast %arg8 : i32 to index
      %c0_11 = arith.constant 0 : index
      %22 = vector.load %arg5[%21, %c0_11] : memref<128x128xf32, #tpu.memory_space<vmem>>, vector<1x128xf32>
      %23 = arith.addf %20, %22 : vector<1x128xf32>
      %24 = arith.index_cast %18 : i32 to index
      %c0_12 = arith.constant 0 : index
      %25 = vector.load %arg7[%24, %c0_12] : memref<256x128xf32, #tpu.memory_space<vmem>>, vector<1x128xf32>
      tpu.vector_store %arg7[%24, %c0_12], %23 {strides = array<i32>} : memref<256x128xf32, #tpu.memory_space<vmem>>, vector<1x128xf32>,
    }
    %c0_6 = arith.constant 0 : index
    %c0_7 = arith.constant 0 : index
    %13 = vector.load %arg7[%c0_6, %c0_7] : memref<256x128xf32, #tpu.memory_space<vmem>>, vector<256x128xf32>
    %14 = arith.truncf %13 : vector<256x128xf32> to vector<256x128xbf16>
    %c0_8 = arith.constant 0 : index
    %c0_9 = arith.constant 0 : index
    %15 = vector.load %arg6[%c0_8, %c0_9] : memref<256x128xbf16, #tpu.memory_space<vmem>>, vector<256x128xbf16>
    tpu.vector_store %arg6[%c0_8, %c0_9], %14 {strides = array<i32>} : memref<256x128xbf16, #tpu.memory_space<vmem>>, vector<256x128xbf16>,
    return
  }
  func.func @transform_0(%arg0: i32, %arg1: memref<128xi32, #tpu.memory_space<smem>>, %arg2: memref<3xi32, #tpu.memory_space<smem>>) -> (i32, i32) {
    %c0_i32 = arith.constant 0 : i32
    %c0_i32_0 = arith.constant 0 : i32
    return %arg0, %c0_i32 : i32, i32
  }
  func.func @transform_1(%arg0: i32, %arg1: memref<128xi32, #tpu.memory_space<smem>>, %arg2: memref<3xi32, #tpu.memory_space<smem>>) -> (i32, i32) {
    %c0_i32 = arith.constant 0 : i32
    %c0_i32_0 = arith.constant 0 : i32
    %c0_i32_1 = arith.constant 0 : i32
    return %c0_i32, %c0_i32_0 : i32, i32
  }
  func.func @transform_2(%arg0: i32, %arg1: memref<128xi32, #tpu.memory_space<smem>>, %arg2: memref<3xi32, #tpu.memory_space<smem>>) -> (i32, i32) {
    %c0_i32 = arith.constant 0 : i32
    %c0_i32_0 = arith.constant 0 : i32
    %c0_i32_1 = arith.constant 0 : i32
    return %c0_i32, %c0_i32_0 : i32, i32
  }
  func.func @transform_3(%arg0: i32, %arg1: memref<128xi32, #tpu.memory_space<smem>>, %arg2: memref<3xi32, #tpu.memory_space<smem>>) -> (i32, i32) {
    %c0_i32 = arith.constant 0 : i32
    %c0_i32_0 = arith.constant 0 : i32
    return %arg0, %c0_i32 : i32, i32
  }
}

module attributes {stable_mosaic.version = 11 : i64} {
  func.func @a_xw_relu_kernel(%arg0: i32, %arg1: i32, %arg2: memref<256x512xf32, #tpu.memory_space<vmem>>, %arg3: memref<512x128xbf16, #tpu.memory_space<vmem>>, %arg4: memref<256x128xf32, #tpu.memory_space<vmem>>, %arg5: memref<256x128xf32, #tpu.memory_space<vmem>>) attributes {dimension_semantics = [#tpu.dimension_semantics<parallel>, #tpu.dimension_semantics<arbitrary>], iteration_bounds = array<i64: 2, 1>, scalar_prefetch = 0 : i64, scratch_operands = 1 : i64, tpu.core_type = #tpu.core_type<tc>, window_params = [{transform_indices = @transform_0, window_bounds = array<i64: 256, 512>}, {transform_indices = @transform_1, window_bounds = array<i64: 512, 128>}, {transform_indices = @transform_2, window_bounds = array<i64: 256, 128>}]} {
    %c0_i32 = arith.constant 0 : i32
    %0 = arith.cmpi eq, %arg1, %c0_i32 : i32
    %1 = arith.extui %0 : i1 to i32
    %c0_i32_0 = arith.constant 0 : i32
    %2 = arith.cmpi ne, %1, %c0_i32_0 : i32
    scf.if %2 {
      %cst_10 = arith.constant 0.000000e+00 : f32
      %13 = vector.broadcast %cst_10 : f32 to vector<256x128xf32>
      %c0_11 = arith.constant 0 : index
      %c0_12 = arith.constant 0 : index
      %14 = vector.load %arg5[%c0_11, %c0_12] : memref<256x128xf32, #tpu.memory_space<vmem>>, vector<256x128xf32>
      tpu.vector_store %arg5[%c0_11, %c0_12], %13 {strides = array<i32>} : memref<256x128xf32, #tpu.memory_space<vmem>>, vector<256x128xf32>,
    } else {
    }
    %c0 = arith.constant 0 : index
    %c0_1 = arith.constant 0 : index
    %3 = vector.load %arg5[%c0, %c0_1] : memref<256x128xf32, #tpu.memory_space<vmem>>, vector<256x128xf32>
    %c0_2 = arith.constant 0 : index
    %c0_3 = arith.constant 0 : index
    %4 = vector.load %arg2[%c0_2, %c0_3] : memref<256x512xf32, #tpu.memory_space<vmem>>, vector<256x512xf32>
    %5 = arith.truncf %4 : vector<256x512xf32> to vector<256x512xbf16>
    %c0_4 = arith.constant 0 : index
    %c0_5 = arith.constant 0 : index
    %6 = vector.load %arg3[%c0_4, %c0_5] : memref<512x128xbf16, #tpu.memory_space<vmem>>, vector<512x128xbf16>
    %cst = arith.constant dense<0.000000e+00> : vector<256x128xf32>
    %7 = tpu.matmul %5, %6, %cst {dimension_numbers = #tpu.dot_dimension_numbers<[1], [0], [0], [1], [0, 0, 1, 1], [], []>} : vector<256x512xbf16>, vector<512x128xbf16>, vector<256x128xf32> -> vector<256x128xf32>
    %8 = arith.addf %3, %7 : vector<256x128xf32>
    %c0_6 = arith.constant 0 : index
    %c0_7 = arith.constant 0 : index
    %9 = vector.load %arg5[%c0_6, %c0_7] : memref<256x128xf32, #tpu.memory_space<vmem>>, vector<256x128xf32>
    tpu.vector_store %arg5[%c0_6, %c0_7], %8 {strides = array<i32>} : memref<256x128xf32, #tpu.memory_space<vmem>>, vector<256x128xf32>,
    %c0_i32_8 = arith.constant 0 : i32
    %10 = arith.cmpi eq, %arg1, %c0_i32_8 : i32
    %11 = arith.extui %10 : i1 to i32
    %c0_i32_9 = arith.constant 0 : i32
    %12 = arith.cmpi ne, %11, %c0_i32_9 : i32
    scf.if %12 {
      %c0_10 = arith.constant 0 : index
      %c0_11 = arith.constant 0 : index
      %13 = vector.load %arg5[%c0_10, %c0_11] : memref<256x128xf32, #tpu.memory_space<vmem>>, vector<256x128xf32>
      %cst_12 = arith.constant 0.000000e+00 : f32
      %14 = vector.broadcast %cst_12 : f32 to vector<256x128xf32>
      %15 = arith.maximumf %13, %14 : vector<256x128xf32>
      %c0_13 = arith.constant 0 : index
      %c0_14 = arith.constant 0 : index
      %16 = vector.load %arg4[%c0_13, %c0_14] : memref<256x128xf32, #tpu.memory_space<vmem>>, vector<256x128xf32>
      tpu.vector_store %arg4[%c0_13, %c0_14], %15 {strides = array<i32>} : memref<256x128xf32, #tpu.memory_space<vmem>>, vector<256x128xf32>,
    } else {
    }
    return
  }
  func.func @transform_0(%arg0: i32, %arg1: i32) -> (i32, i32) {
    %c0_i32 = arith.constant 0 : i32
    return %arg0, %arg1 : i32, i32
  }
  func.func @transform_1(%arg0: i32, %arg1: i32) -> (i32, i32) {
    %c0_i32 = arith.constant 0 : i32
    %c0_i32_0 = arith.constant 0 : i32
    return %arg1, %c0_i32 : i32, i32
  }
  func.func @transform_2(%arg0: i32, %arg1: i32) -> (i32, i32) {
    %c0_i32 = arith.constant 0 : i32
    %c0_i32_0 = arith.constant 0 : i32
    return %arg0, %c0_i32 : i32, i32
  }
}

</mosaic_0001>

<llo_original>
// kernel: custom-call.1
$region0: #{custom-call.1}
  %s0 = inlined_call_operand.vmem [shape: u32[3], index: 0, kind: output, shape index: {}]

// kernel: gunpool_block_forward.3
$region0: #{gunpool_block_forward.3}
  #allocation0 [shape = 'u32[]', space=smem, size = 0x4, offset = 0x4, fixed_abs, tag = 'smem constant byte address 0x4 - core index']
  #allocation1 [shape = 'u32[144,128]{1,0:T(1,128)}', space=vmem, size = 0x12000, scoped, tag = 'internal scratch']
  %s0 = inlined_call_operand.vmem [shape: bf16[128,256], index: 0, kind: input, shape index: {}]
  %s1 = inlined_call_operand.vmem [shape: bf16[256,128], index: 1, kind: input, shape index: {}]
  %s2 = inlined_call_operand.vmem [shape: f32[128,128], index: 2, kind: output, shape index: {}]
  %s3 = sld [smem:[#allocation0]]
  $region18: #{gunpool_block_forward.3} parent=0
    _
  %s5 = ssub.s32 1, %s3
  %s6 = scalar_select 0, %s5, %s3
  // Predicated region
  $region2: #{gunpool_block_forward.3} parent=0 // pred_check
    _
  $region3: #{gunpool_block_forward.3} parent=0 // pred_check_branch
    %8 = sbr.rel (0) target = $region5
  $region4: #{gunpool_block_forward.3} parent=0 // pred_region
    _
  $region5: #{gunpool_block_forward.3} parent=0 // pred_fallthru
    _
  // Predicated region
  $region6: #{gunpool_block_forward.3} parent=0 // pred_check
    _
  $region7: #{gunpool_block_forward.3} parent=0 // pred_check_branch
    %10 = sbr.rel (0) target = $region9
  $region8: #{gunpool_block_forward.3} parent=0 // pred_region
    _
  $region9: #{gunpool_block_forward.3} parent=0 // pred_fallthru
    _
  %v12 = vld [vmem:[%s0] sm:$0xff]
  %v13 = vld [vmem:[%s0 + $0x8] sm:$0xff]
  %v14 = vld [vmem:[%s0 + $0x10] sm:$0xff]
  %v15 = vld [vmem:[%s0 + $0x18] sm:$0xff]
  %v16 = vld [vmem:[%s0 + $0x20] sm:$0xff]
  %v17 = vld [vmem:[%s0 + $0x28] sm:$0xff]
  %v18 = vld [vmem:[%s0 + $0x30] sm:$0xff]
  %v19 = vld [vmem:[%s0 + $0x38] sm:$0xff]
  %v20 = vld [vmem:[%s0 + $0x40] sm:$0xff]
  %v21 = vld [vmem:[%s0 + $0x48] sm:$0xff]
  %v22 = vld [vmem:[%s0 + $0x50] sm:$0xff]
  %v23 = vld [vmem:[%s0 + $0x58] sm:$0xff]
  %v24 = vld [vmem:[%s0 + $0x60] sm:$0xff]
  %v25 = vld [vmem:[%s0 + $0x68] sm:$0xff]
  %v26 = vld [vmem:[%s0 + $0x70] sm:$0xff]
  %v27 = vld [vmem:[%s0 + $0x78] sm:$0xff]
  %v28 = vld [vmem:[%s1] sm:$0xf]
  %v29 = vld [vmem:[%s1 + $0x4] sm:$0xf]
  %v30 = vld [vmem:[%s1 + $0x8] sm:$0xf]
  %v31 = vld [vmem:[%s1 + $0xc] sm:$0xf]
  %v32 = vld [vmem:[%s1 + $0x10] sm:$0xf]
  %v33 = vld [vmem:[%s1 + $0x14] sm:$0xf]
  %v34 = vld [vmem:[%s1 + $0x18] sm:$0xf]
  %v35 = vld [vmem:[%s1 + $0x1c] sm:$0xf]
  %v36 = vld [vmem:[%s1 + $0x20] sm:$0xf]
  %v37 = vld [vmem:[%s1 + $0x24] sm:$0xf]
  %v38 = vld [vmem:[%s1 + $0x28] sm:$0xf]
  %v39 = vld [vmem:[%s1 + $0x2c] sm:$0xf]
  %v40 = vld [vmem:[%s1 + $0x30] sm:$0xf]
  %v41 = vld [vmem:[%s1 + $0x34] sm:$0xf]
  %v42 = vld [vmem:[%s1 + $0x38] sm:$0xf]
  %v43 = vld [vmem:[%s1 + $0x3c] sm:$0xf]
  %v44 = vld [vmem:[%s1 + $0x40] sm:$0xf]
  %v45 = vld [vmem:[%s1 + $0x44] sm:$0xf]
  %v46 = vld [vmem:[%s1 + $0x48] sm:$0xf]
  %v47 = vld [vmem:[%s1 + $0x4c] sm:$0xf]
  %v48 = vld [vmem:[%s1 + $0x50] sm:$0xf]
  %v49 = vld [vmem:[%s1 + $0x54] sm:$0xf]
  %v50 = vld [vmem:[%s1 + $0x58] sm:$0xf]
  %v51 = vld [vmem:[%s1 + $0x5c] sm:$0xf]
  %v52 = vld [vmem:[%s1 + $0x60] sm:$0xf]
  %v53 = vld [vmem:[%s1 + $0x64] sm:$0xf]
  %v54 = vld [vmem:[%s1 + $0x68] sm:$0xf]
  %v55 = vld [vmem:[%s1 + $0x6c] sm:$0xf]
  %v56 = vld [vmem:[%s1 + $0x70] sm:$0xf]
  %v57 = vld [vmem:[%s1 + $0x74] sm:$0xf]
  %v58 = vld [vmem:[%s1 + $0x78] sm:$0xf]
  %v59 = vld [vmem:[%s1 + $0x7c] sm:$0xf]
  %v76 = vunpack.c.l.b16 %v12
  %v77 = vunpack.c.h.b16 %v12
  %v78 = vunpack.c.l.b16 %v13
  %v79 = vunpack.c.h.b16 %v13
  %v80 = vunpack.c.l.b16 %v14
  %v81 = vunpack.c.h.b16 %v14
  %v82 = vunpack.c.l.b16 %v15
  %v83 = vunpack.c.h.b16 %v15
  %v84 = vunpack.c.l.b16 %v16
  %v85 = vunpack.c.h.b16 %v16
  %v86 = vunpack.c.l.b16 %v17
  %v87 = vunpack.c.h.b16 %v17
  %v88 = vunpack.c.l.b16 %v18
  %v89 = vunpack.c.h.b16 %v18
  %v90 = vunpack.c.l.b16 %v19
  %v91 = vunpack.c.h.b16 %v19
  %v92 = vunpack.c.l.b16 %v20
  %v93 = vunpack.c.h.b16 %v20
  %v94 = vunpack.c.l.b16 %v21
  %v95 = vunpack.c.h.b16 %v21
  %v96 = vunpack.c.l.b16 %v22
  %v97 = vunpack.c.h.b16 %v22
  %v98 = vunpack.c.l.b16 %v23
  %v99 = vunpack.c.h.b16 %v23
  %v100 = vunpack.c.l.b16 %v24
  %v101 = vunpack.c.h.b16 %v24
  %v102 = vunpack.c.l.b16 %v25
  %v103 = vunpack.c.h.b16 %v25
  %v104 = vunpack.c.l.b16 %v26
  %v105 = vunpack.c.h.b16 %v26
  %v106 = vunpack.c.l.b16 %v27
  %v107 = vunpack.c.h.b16 %v27
  %v108 = vpack.c.b16 %v78, %v76
  %v109 = vpack.c.b16 %v79, %v77
  %v110 = vpack.c.b16 %v82, %v80
  %v111 = vpack.c.b16 %v83, %v81
  %v112 = vpack.c.b16 %v86, %v84
  %v113 = vpack.c.b16 %v87, %v85
  %v114 = vpack.c.b16 %v90, %v88
  %v115 = vpack.c.b16 %v91, %v89
  %v116 = vpack.c.b16 %v94, %v92
  %v117 = vpack.c.b16 %v95, %v93
  %v118 = vpack.c.b16 %v98, %v96
  %v119 = vpack.c.b16 %v99, %v97
  %v120 = vpack.c.b16 %v102, %v100
  %v121 = vpack.c.b16 %v103, %v101
  %v122 = vpack.c.b16 %v106, %v104
  %v123 = vpack.c.b16 %v107, %v105
  %v172 = vunpack.c.l.b16 %v28
  %v173 = vunpack.c.l.b16 %v29
  %v174 = vunpack.c.l.b16 %v30
  %v175 = vunpack.c.l.b16 %v31
  %v176 = vunpack.c.l.b16 %v32
  %v177 = vunpack.c.l.b16 %v33
  %v178 = vunpack.c.l.b16 %v34
  %v179 = vunpack.c.l.b16 %v35
  %v180 = vunpack.c.l.b16 %v36
  %v181 = vunpack.c.l.b16 %v37
  %v182 = vunpack.c.l.b16 %v38
  %v183 = vunpack.c.l.b16 %v39
  %v184 = vunpack.c.l.b16 %v40
  %v185 = vunpack.c.l.b16 %v41
  %v186 = vunpack.c.l.b16 %v42
  %v187 = vunpack.c.l.b16 %v43
  %v188 = vunpack.c.l.b16 %v44
  %v189 = vunpack.c.l.b16 %v45
  %v190 = vunpack.c.l.b16 %v46
  %v191 = vunpack.c.l.b16 %v47
  %v192 = vunpack.c.l.b16 %v48
  %v193 = vunpack.c.l.b16 %v49
  %v194 = vunpack.c.l.b16 %v50
  %v195 = vunpack.c.l.b16 %v51
  %v196 = vunpack.c.l.b16 %v52
  %v197 = vunpack.c.l.b16 %v53
  %v198 = vunpack.c.l.b16 %v54
  %v199 = vunpack.c.l.b16 %v55
  %v200 = vunpack.c.l.b16 %v56
  %v201 = vunpack.c.l.b16 %v57
  %v202 = vunpack.c.l.b16 %v58
  %v203 = vunpack.c.l.b16 %v59
  %v204 = vpack.c.b16 %v173, %v172
  %v205 = vpack.c.b16 %v175, %v174
  %v206 = vpack.c.b16 %v177, %v176
  %v207 = vpack.c.b16 %v179, %v178
  %v208 = vpack.c.b16 %v181, %v180
  %v209 = vpack.c.b16 %v183, %v182
  %v210 = vpack.c.b16 %v185, %v184
  %v211 = vpack.c.b16 %v187, %v186
  %v212 = vpack.c.b16 %v189, %v188
  %v213 = vpack.c.b16 %v191, %v190
  %v214 = vpack.c.b16 %v193, %v192
  %v215 = vpack.c.b16 %v195, %v194
  %v216 = vpack.c.b16 %v197, %v196
  %v217 = vpack.c.b16 %v199, %v198
  %v218 = vpack.c.b16 %v201, %v200
  %v219 = vpack.c.b16 %v203, %v202
  %236 = vmatprep.subr.bf16.mxu0 0
  %237 = vmatpush1.bf16.msra.mxu0 %v211
  %238 = vmatprep.subr.bf16.mxu0 0
  %239 = vmatpush1.bf16.msra.mxu0 %v210
  %240 = vmatprep.subr.bf16.mxu0 0
  %241 = vmatpush1.bf16.msra.mxu0 %v209
  %242 = vmatprep.subr.bf16.mxu0 0
  %243 = vmatpush1.bf16.msra.mxu0 %v208
  %244 = vmatprep.subr.bf16.mxu0 0
  %245 = vmatpush1.bf16.msra.mxu0 %v207
  %246 = vmatprep.subr.bf16.mxu0 0
  %247 = vmatpush1.bf16.msra.mxu0 %v206
  %248 = vmatprep.subr.bf16.mxu0 0
  %249 = vmatpush1.bf16.msra.mxu0 %v205
  %250 = vmatprep.subr.bf16.mxu0 0
  %251 = vmatpush1.bf16.msra.mxu0 %v204
  %252 = vmatprep.subr.bf16.mxu0 0
  %253 = vmatpush2.bf16.msra.mxu0 %v219
  %254 = vmatprep.subr.bf16.mxu0 0
  %255 = vmatpush2.bf16.msra.mxu0 %v218
  %256 = vmatprep.subr.bf16.mxu0 0
  %257 = vmatpush2.bf16.msra.mxu0 %v217
  %258 = vmatprep.subr.bf16.mxu0 0
  %259 = vmatpush2.bf16.msra.mxu0 %v216
  %260 = vmatprep.subr.bf16.mxu0 0
  %261 = vmatpush2.bf16.msra.mxu0 %v215
  %262 = vmatprep.subr.bf16.mxu0 0
  %263 = vmatpush2.bf16.msra.mxu0 %v214
  %264 = vmatprep.subr.bf16.mxu0 0
  %265 = vmatpush2.bf16.msra.mxu0 %v213
  %266 = vmatprep.subr.bf16.mxu0 0
  %267 = vmatpush2.bf16.msra.mxu0 %v212
  %268 = vmatprep.mubr.bf16.mxu0 %v109
  %269 = vmatmul.mubr.bf16.gmra.mxu0 %v108
  %v270 = vpop.f32.mrf.mxu0
  %v271 = vadd.f32 0.0, %v270
  %v272 = vpop.f32.mrf.mxu0
  %v273 = vpop.f32.mrf.mxu0
  %v274 = vadd.f32 0.0, %v273
  %v275 = vpop.f32.mrf.mxu0
  %276 = vmatprep.mubr.bf16.mxu0 %v111
  %277 = vmatmul.mubr.bf16.gmra.mxu0 %v110
  %v278 = vpop.f32.mrf.mxu0
  %v279 = vadd.f32 0.0, %v278
  %v280 = vpop.f32.mrf.mxu0
  %v281 = vpop.f32.mrf.mxu0
  %v282 = vadd.f32 0.0, %v281
  %v283 = vpop.f32.mrf.mxu0
  %284 = vmatprep.mubr.bf16.mxu0 %v113
  %285 = vmatmul.mubr.bf16.gmra.mxu0 %v112
  %v286 = vpop.f32.mrf.mxu0
  %v287 = vadd.f32 0.0, %v286
  %v288 = vpop.f32.mrf.mxu0
  %v289 = vpop.f32.mrf.mxu0
  %v290 = vadd.f32 0.0, %v289
  %v291 = vpop.f32.mrf.mxu0
  %292 = vmatprep.mubr.bf16.mxu0 %v115
  %293 = vmatmul.mubr.bf16.gmra.mxu0 %v114
  %v294 = vpop.f32.mrf.mxu0
  %v295 = vadd.f32 0.0, %v294
  %v296 = vpop.f32.mrf.mxu0
  %v297 = vpop.f32.mrf.mxu0
  %v298 = vadd.f32 0.0, %v297
  %v299 = vpop.f32.mrf.mxu0
  %300 = vmatprep.mubr.bf16.mxu0 %v117
  %301 = vmatmul.mubr.bf16.gmra.mxu0 %v116
  %v302 = vpop.f32.mrf.mxu0
  %v303 = vadd.f32 0.0, %v302
  %v304 = vpop.f32.mrf.mxu0
  %v305 = vpop.f32.mrf.mxu0
  %v306 = vadd.f32 0.0, %v305
  %v307 = vpop.f32.mrf.mxu0
  %308 = vmatprep.mubr.bf16.mxu0 %v119
  %309 = vmatmul.mubr.bf16.gmra.mxu0 %v118
  %v310 = vpop.f32.mrf.mxu0
  %v311 = vadd.f32 0.0, %v310
  %v312 = vpop.f32.mrf.mxu0
  %v313 = vpop.f32.mrf.mxu0
  %v314 = vadd.f32 0.0, %v313
  %v315 = vpop.f32.mrf.mxu0
  %316 = vmatprep.mubr.bf16.mxu0 %v121
  %317 = vmatmul.mubr.bf16.gmra.mxu0 %v120
  %v318 = vpop.f32.mrf.mxu0
  %v319 = vadd.f32 0.0, %v318
  %v320 = vpop.f32.mrf.mxu0
  %v321 = vpop.f32.mrf.mxu0
  %v322 = vadd.f32 0.0, %v321
  %v323 = vpop.f32.mrf.mxu0
  %324 = vmatprep.mubr.bf16.mxu0 %v123
  %325 = vmatmul.mubr.bf16.gmra.mxu0 %v122
  %v326 = vpop.f32.mrf.mxu0
  %v327 = vadd.f32 0.0, %v326
  %v328 = vpop.f32.mrf.mxu0
  %v329 = vpop.f32.mrf.mxu0
  %v330 = vadd.f32 0.0, %v329
  %v331 = vpop.f32.mrf.mxu0
  %332 = vdwg.mxu0
  %333 = vst [vmem:[%s2] sm:$0xff] %v271
  %334 = vst [vmem:[%s2 + $0x8] sm:$0xff] %v274
  %335 = vst [vmem:[%s2 + $0x10] sm:$0xff] %v279
  %336 = vst [vmem:[%s2 + $0x18] sm:$0xff] %v282
  %337 = vst [vmem:[%s2 + $0x20] sm:$0xff] %v287
  %338 = vst [vmem:[%s2 + $0x28] sm:$0xff] %v290
  %339 = vst [vmem:[%s2 + $0x30] sm:$0xff] %v295
  %340 = vst [vmem:[%s2 + $0x38] sm:$0xff] %v298
  %341 = vst [vmem:[%s2 + $0x40] sm:$0xff] %v303
  %342 = vst [vmem:[%s2 + $0x48] sm:$0xff] %v306
  %343 = vst [vmem:[%s2 + $0x50] sm:$0xff] %v311
  %344 = vst [vmem:[%s2 + $0x58] sm:$0xff] %v314
  %345 = vst [vmem:[%s2 + $0x60] sm:$0xff] %v319
  %346 = vst [vmem:[%s2 + $0x68] sm:$0xff] %v322
  %347 = vst [vmem:[%s2 + $0x70] sm:$0xff] %v327
  %348 = vst [vmem:[%s2 + $0x78] sm:$0xff] %v330
  // Predicated region
  $region10: #{gunpool_block_forward.3} parent=0 // pred_check
    _
  $region11: #{gunpool_block_forward.3} parent=0 // pred_check_branch
    %350 = sbr.rel (0) target = $region13
  $region12: #{gunpool_block_forward.3} parent=0 // pred_region
    _
  $region13: #{gunpool_block_forward.3} parent=0 // pred_fallthru
    _
  // Predicated region
  $region14: #{gunpool_block_forward.3} parent=0 // pred_check
    _
  $region15: #{gunpool_block_forward.3} parent=0 // pred_check_branch
    %352 = sbr.rel (0) target = $region17
  $region16: #{gunpool_block_forward.3} parent=0 // pred_region
    _
  $region17: #{gunpool_block_forward.3} parent=0 // pred_fallthru
    _

// kernel: gunpool_block_forward.4
$region0: #{gunpool_block_forward.4}
  #allocation0 [shape = 'u32[]', space=smem, size = 0x4, offset = 0x4, fixed_abs, tag = 'smem constant byte address 0x4 - core index']
  #allocation1 [shape = 'u32[144,128]{1,0:T(1,128)}', space=vmem, size = 0x12000, scoped, tag = 'internal scratch']
  #allocation2 [shape = 'f32[256,128]{1,0:T(8,128)}', space=vmem, size = 0x20000, scoped, tag = 'scratch operand']
  #allocation3 [shape = 's32[1]{0}', space=sflag, size = 0x4, scoped, tag = 'scoped memory for gunpool_block_forward.4']
  #allocation4 [shape = 'u8[512]{0}', space=smem, size = 0x200, scoped, tag = 'prefetched SMEM operand 0']
  #allocation5 [shape = 'u8[512]{0}', space=smem, size = 0x200, scoped, tag = 'prefetched SMEM operand 1']
  %s0 = inlined_call_operand.vmem [shape: s32[128], index: 0, kind: input, shape index: {}]
  %s1 = inlined_call_operand.vmem [shape: s32[3], index: 1, kind: input, shape index: {}]
  %s2 = inlined_call_operand.vmem [shape: f32[512,256], index: 2, kind: input, shape index: {}]
  %s3 = inlined_call_operand.vmem [shape: bf16[256,128], index: 3, kind: input, shape index: {}]
  %s4 = inlined_call_operand.vmem [shape: f32[128,128], index: 4, kind: input, shape index: {}]
  %s5 = inlined_call_operand.vmem [shape: bf16[512,128], index: 5, kind: output, shape index: {}]
  %s6 = sld [smem:[#allocation0]]
  $region52: #{gunpool_block_forward.4} parent=0
    _
  %s8 = ssub.s32 1, %s6
  %s9 = scalar_select 0, %s8, %s6
  %s10 = sshll.u32 %s0, 4
  %s11 = int_to_ptr.vmem [resolvable:$true] %s10
  %13 = dma.vmem_to_smem %s11, 16, [#allocation4], [#allocation3]
  %s14 = sshll.u32 %s1, 4
  %s15 = int_to_ptr.vmem [resolvable:$true] %s14
  %17 = dma.vmem_to_smem %s15, 16, [#allocation5], [#allocation3]
  %18 = dma.done [#allocation3], 32
  %19 = sfence
  loop: start=0, step=1, limit=4
  $region2: #{gunpool_block_forward.4} parent=0 // loop_pre_header
    _
  $region3: #{gunpool_block_forward.4} parent=0 // loop_header
    %s21 = sphi 0, %s25
    %p22 = scmp.ge.s32.totalorder %s21, 4
    %s31 = sphi 0, %s33
    %s34 = sphi 0, %s31
    %s35 = sphi 0, %s34
    %s51 = sphi 0, %s35
    %s55 = sphi 0, %s55
    %s57 = sphi 0, %s55
    %s58 = sphi 0, %s57
    %s72 = sphi 0, %s58
    %s76 = sphi 0, %s76
    %s78 = sphi 0, %s76
    %s79 = sphi 0, %s78
    %s93 = sphi 0, %s79
    %s99 = sphi 0, %s101
    %s102 = sphi 0, %s99
    %s103 = sphi 0, %s102
    %s119 = sphi 0, %s103
  $region4: #{gunpool_block_forward.4} parent=0 // loop_header_branch
    %24 = sbr.rel (%p22) target = $region8
  $region5: #{gunpool_block_forward.4} parent=0 // loop_body
    %s26 = ssub.s32 %s21, 1
    %s27 = ssub.s32 %s21, 2
    %s28 = sadd.s32 %s21, 1
    %s29 = ssub.s32 %s21, %s28
    %p30 = scmp.eq.s32.totalorder %s29, 0
    %s32 = sadd.s32 %s31, 1
    %s33 = scalar_select %p30, %s31, %s32
    %p36 = pneg %p30
    %p37 = scmp.eq.s32.totalorder %s21, 1
    %p38 = por %p36, %p37
    %p39 = scmp.ne.s32.totalorder %s31, %s34
    %p40 = scmp.eq.s32.totalorder %s21, 0
    %p41 = por %p39, %p40
    %p42 = scmp.ne.s32.totalorder %s31, %s34
    %p43 = scmp.eq.s32.totalorder %s26, 1
    %p44 = por %p42, %p43
    %p45 = scmp.ne.s32.totalorder %s34, %s35
    %p46 = scmp.eq.s32.totalorder %s26, 0
    %p47 = por %p45, %p46
    %p48 = scmp.ne.s32.totalorder %s34, %s35
    %p49 = scmp.eq.s32.totalorder %s27, 1
    %p50 = por %p48, %p49
    %p52 = scmp.ne.s32.totalorder %s35, %s51
    %p53 = scmp.eq.s32.totalorder %s27, 0
    %p54 = por %p52, %p53
    %s56 = sadd.s32 %s55, 1
    %p59 = scmp.eq.s32.totalorder %s21, 1
    %p60 = scmp.ne.s32.totalorder %s55, %s57
    %p61 = scmp.eq.s32.totalorder %s21, 0
    %p62 = por %p60, %p61
    %p63 = scmp.ne.s32.totalorder %s55, %s57
    %p64 = scmp.eq.s32.totalorder %s26, 1
    %p65 = por %p63, %p64
    %p66 = scmp.ne.s32.totalorder %s57, %s58
    %p67 = scmp.eq.s32.totalorder %s26, 0
    %p68 = por %p66, %p67
    %p69 = scmp.ne.s32.totalorder %s57, %s58
    %p70 = scmp.eq.s32.totalorder %s27, 1
    %p71 = por %p69, %p70
    %p73 = scmp.ne.s32.totalorder %s58, %s72
    %p74 = scmp.eq.s32.totalorder %s27, 0
    %p75 = por %p73, %p74
    %s77 = sadd.s32 %s76, 1
    %p80 = scmp.eq.s32.totalorder %s21, 1
    %p81 = scmp.ne.s32.totalorder %s76, %s78
    %p82 = scmp.eq.s32.totalorder %s21, 0
    %p83 = por %p81, %p82
    %p84 = scmp.ne.s32.totalorder %s76, %s78
    %p85 = scmp.eq.s32.totalorder %s26, 1
    %p86 = por %p84, %p85
    %p87 = scmp.ne.s32.totalorder %s78, %s79
    %p88 = scmp.eq.s32.totalorder %s26, 0
    %p89 = por %p87, %p88
    %p90 = scmp.ne.s32.totalorder %s78, %s79
    %p91 = scmp.eq.s32.totalorder %s27, 1
    %p92 = por %p90, %p91
    %p94 = scmp.ne.s32.totalorder %s79, %s93
    %p95 = scmp.eq.s32.totalorder %s27, 0
    %p96 = por %p94, %p95
    %s97 = ssub.s32 %s21, %s28
    %p98 = scmp.eq.s32.totalorder %s97, 0
    %s100 = sadd.s32 %s99, 1
    %s101 = scalar_select %p98, %s99, %s100
    %p104 = pneg %p98
    %p105 = scmp.eq.s32.totalorder %s21, 1
    %p106 = por %p104, %p105
    %p107 = scmp.ne.s32.totalorder %s99, %s102
    %p108 = scmp.eq.s32.totalorder %s21, 0
    %p109 = por %p107, %p108
    %p110 = scmp.ne.s32.totalorder %s99, %s102
    %p111 = scmp.eq.s32.totalorder %s26, 1
    %p112 = por %p110, %p111
    %p113 = scmp.ne.s32.totalorder %s102, %s103
    %p114 = scmp.eq.s32.totalorder %s26, 0
    %p115 = por %p113, %p114
    %p116 = scmp.ne.s32.totalorder %s102, %s103
    %p117 = scmp.eq.s32.totalorder %s27, 1
    %p118 = por %p116, %p117
    %p120 = scmp.ne.s32.totalorder %s103, %s119
    %p121 = scmp.eq.s32.totalorder %s27, 0
    %p122 = por %p120, %p121
    %p123 = scmp.le.s32.totalorder 1, %s21
    %p124 = scmp.lt.s32.totalorder %s21, 3
    %p125 = pnand %p123, %p124
    %p126 = pneg %p125
    // Predicated region
    $region9: #{gunpool_block_forward.4} parent=5 // pred_check
      _
    $region10: #{gunpool_block_forward.4} parent=5 // pred_check_branch
      %128 = sbr.rel (%p125) target = $region12
    $region11: #{gunpool_block_forward.4} parent=5 // pred_region
      %s129 = ssub.s32 %s21, 1
      // Predicated region
      $region13: #{gunpool_block_forward.4} parent=11 // pred_check
        %p130 = pneg %p68
      $region14: #{gunpool_block_forward.4} parent=11 // pred_check_branch
        %132 = sbr.rel (%p130) target = $region16
      $region15: #{gunpool_block_forward.4} parent=11 // pred_region
        _
      $region16: #{gunpool_block_forward.4} parent=11 // pred_fallthru
        _
      // Predicated region
      $region17: #{gunpool_block_forward.4} parent=11 // pred_check
        %p133 = pneg %p89
      $region18: #{gunpool_block_forward.4} parent=11 // pred_check_branch
        %135 = sbr.rel (%p133) target = $region20
      $region19: #{gunpool_block_forward.4} parent=11 // pred_region
        _
      $region20: #{gunpool_block_forward.4} parent=11 // pred_fallthru
        _
    $region12: #{gunpool_block_forward.4} parent=5 // pred_fallthru
      _
    %p136 = scmp.lt.s32.totalorder %s21, 2
    // Predicated region
    $region21: #{gunpool_block_forward.4} parent=5 // pred_check
      %p137 = pneg %p136
    $region22: #{gunpool_block_forward.4} parent=5 // pred_check_branch
      %139 = sbr.rel (%p137) target = $region24
    $region23: #{gunpool_block_forward.4} parent=5 // pred_region
      // Predicated region
      $region25: #{gunpool_block_forward.4} parent=23 // pred_check
        %p140 = pneg %p41
      $region26: #{gunpool_block_forward.4} parent=23 // pred_check_branch
        %142 = sbr.rel (%p140) target = $region28
      $region27: #{gunpool_block_forward.4} parent=23 // pred_region
        %s143 = smul.u32 32, %s21
        %p144 = scmp.lt.s32.totalorder %s143, 63
        %s145 = scalar_select %p144, %s143, 63
        %s146 = smul.addr %s145, 2
        %s147 = smul.addr %s146, 8
        %s148 = scalar_lea.vmem %s2, %s147
        %s149 = smul.u32 32, %s21
      $region28: #{gunpool_block_forward.4} parent=23 // pred_fallthru
        _
    $region24: #{gunpool_block_forward.4} parent=5 // pred_fallthru
      _
    %p150 = scmp.le.s32.totalorder 1, %s21
    %p151 = scmp.lt.s32.totalorder %s21, 3
    %p152 = pnand %p150, %p151
    %p153 = pneg %p152
    // Predicated region
    $region29: #{gunpool_block_forward.4} parent=5 // pred_check
      _
    $region30: #{gunpool_block_forward.4} parent=5 // pred_check_branch
      %155 = sbr.rel (%p152) target = $region32
    $region31: #{gunpool_block_forward.4} parent=5 // pred_region
      %s156 = ssub.s32 %s21, 1
      %s157 = smul.u32 32, %s26
      %p158 = scmp.lt.s32.totalorder %s157, 63
      %s159 = scalar_select %p158, %s157, 63
      %s160 = smul.addr %s159, 2
      %s161 = smul.addr %s160, 8
      %s162 = scalar_lea.vmem %s2, %s161
      %p163 = pneg %p47
      %p164 = pneg %p44
      %p165 = pneg %p68
      %p166 = pneg %p65
      %p167 = pneg %p89
      %p168 = pneg %p86
      %p169 = pneg %p115
      %p170 = pneg %p112
      %s171 = smul.u32 32, %s26
      %p172 = scmp.lt.s32.totalorder %s171, 63
      %s173 = scalar_select %p172, %s171, 63
      %s174 = smul.addr %s173, 4
      %s175 = scalar_lea.vmem %s5, %s174
      %s176 = smul.u32 32, %s26
      %p177 = scmp.lt.s32.totalorder %s176, 63
      %s178 = scalar_select %p177, %s176, 63
      %s179 = smul.addr %s178, 2
      %s180 = smul.addr %s179, 8
      %s181 = scalar_lea.vmem %s2, %s180
      %s182 = smul.u32 32, %s26
      %s183 = smul.u32 32, %s26
      %p184 = scmp.lt.s32.totalorder %s183, 63
      %s185 = scalar_select %p184, %s183, 63
      %s186 = smul.addr %s185, 4
      %s187 = scalar_lea.vmem %s5, %s186
      %s188 = smul.u32 32, %s26
      %s190 = smul.u32 %s26, 256
      %v191 = vld [vmem:[%s181] sm:$0xff]
      %v192 = vld [vmem:[%s181 + $0x8] sm:$0xff]
      %v193 = vld [vmem:[%s181 + $0x10] sm:$0xff]
      %v194 = vld [vmem:[%s181 + $0x18] sm:$0xff]
      %v195 = vld [vmem:[%s181 + $0x20] sm:$0xff]
      %v196 = vld [vmem:[%s181 + $0x28] sm:$0xff]
      %v197 = vld [vmem:[%s181 + $0x30] sm:$0xff]
      %v198 = vld [vmem:[%s181 + $0x38] sm:$0xff]
      %v199 = vld [vmem:[%s181 + $0x40] sm:$0xff]
      %v200 = vld [vmem:[%s181 + $0x48] sm:$0xff]
      %v201 = vld [vmem:[%s181 + $0x50] sm:$0xff]
      %v202 = vld [vmem:[%s181 + $0x58] sm:$0xff]
      %v203 = vld [vmem:[%s181 + $0x60] sm:$0xff]
      %v204 = vld [vmem:[%s181 + $0x68] sm:$0xff]
      %v205 = vld [vmem:[%s181 + $0x70] sm:$0xff]
      %v206 = vld [vmem:[%s181 + $0x78] sm:$0xff]
      %v207 = vld [vmem:[%s181 + $0x80] sm:$0xff]
      %v208 = vld [vmem:[%s181 + $0x88] sm:$0xff]
      %v209 = vld [vmem:[%s181 + $0x90] sm:$0xff]
      %v210 = vld [vmem:[%s181 + $0x98] sm:$0xff]
      %v211 = vld [vmem:[%s181 + $0xa0] sm:$0xff]
      %v212 = vld [vmem:[%s181 + $0xa8] sm:$0xff]
      %v213 = vld [vmem:[%s181 + $0xb0] sm:$0xff]
      %v214 = vld [vmem:[%s181 + $0xb8] sm:$0xff]
      %v215 = vld [vmem:[%s181 + $0xc0] sm:$0xff]
      %v216 = vld [vmem:[%s181 + $0xc8] sm:$0xff]
      %v217 = vld [vmem:[%s181 + $0xd0] sm:$0xff]
      %v218 = vld [vmem:[%s181 + $0xd8] sm:$0xff]
      %v219 = vld [vmem:[%s181 + $0xe0] sm:$0xff]
      %v220 = vld [vmem:[%s181 + $0xe8] sm:$0xff]
      %v221 = vld [vmem:[%s181 + $0xf0] sm:$0xff]
      %v222 = vld [vmem:[%s181 + $0xf8] sm:$0xff]
      %v223 = vld [vmem:[%s181 + $0x100] sm:$0xff]
      %v224 = vld [vmem:[%s181 + $0x108] sm:$0xff]
      %v225 = vld [vmem:[%s181 + $0x110] sm:$0xff]
      %v226 = vld [vmem:[%s181 + $0x118] sm:$0xff]
      %v227 = vld [vmem:[%s181 + $0x120] sm:$0xff]
      %v228 = vld [vmem:[%s181 + $0x128] sm:$0xff]
      %v229 = vld [vmem:[%s181 + $0x130] sm:$0xff]
      %v230 = vld [vmem:[%s181 + $0x138] sm:$0xff]
      %v231 = vld [vmem:[%s181 + $0x140] sm:$0xff]
      %v232 = vld [vmem:[%s181 + $0x148] sm:$0xff]
      %v233 = vld [vmem:[%s181 + $0x150] sm:$0xff]
      %v234 = vld [vmem:[%s181 + $0x158] sm:$0xff]
      %v235 = vld [vmem:[%s181 + $0x160] sm:$0xff]
      %v236 = vld [vmem:[%s181 + $0x168] sm:$0xff]
      %v237 = vld [vmem:[%s181 + $0x170] sm:$0xff]
      %v238 = vld [vmem:[%s181 + $0x178] sm:$0xff]
      %v239 = vld [vmem:[%s181 + $0x180] sm:$0xff]
      %v240 = vld [vmem:[%s181 + $0x188] sm:$0xff]
      %v241 = vld [vmem:[%s181 + $0x190] sm:$0xff]
      %v242 = vld [vmem:[%s181 + $0x198] sm:$0xff]
      %v243 = vld [vmem:[%s181 + $0x1a0] sm:$0xff]
      %v244 = vld [vmem:[%s181 + $0x1a8] sm:$0xff]
      %v245 = vld [vmem:[%s181 + $0x1b0] sm:$0xff]
      %v246 = vld [vmem:[%s181 + $0x1b8] sm:$0xff]
      %v247 = vld [vmem:[%s181 + $0x1c0] sm:$0xff]
      %v248 = vld [vmem:[%s181 + $0x1c8] sm:$0xff]
      %v249 = vld [vmem:[%s181 + $0x1d0] sm:$0xff]
      %v250 = vld [vmem:[%s181 + $0x1d8] sm:$0xff]
      %v251 = vld [vmem:[%s181 + $0x1e0] sm:$0xff]
      %v252 = vld [vmem:[%s181 + $0x1e8] sm:$0xff]
      %v253 = vld [vmem:[%s181 + $0x1f0] sm:$0xff]
      %v254 = vld [vmem:[%s181 + $0x1f8] sm:$0xff]
      %v255 = vpack.c.bf16 %v193, %v191
      %v256 = vpack.c.bf16 %v194, %v192
      %v257 = vpack.c.bf16 %v197, %v195
      %v258 = vpack.c.bf16 %v198, %v196
      %v259 = vpack.c.bf16 %v201, %v199
      %v260 = vpack.c.bf16 %v202, %v200
      %v261 = vpack.c.bf16 %v205, %v203
      %v262 = vpack.c.bf16 %v206, %v204
      %v263 = vpack.c.bf16 %v209, %v207
      %v264 = vpack.c.bf16 %v210, %v208
      %v265 = vpack.c.bf16 %v213, %v211
      %v266 = vpack.c.bf16 %v214, %v212
      %v267 = vpack.c.bf16 %v217, %v215
      %v268 = vpack.c.bf16 %v218, %v216
      %v269 = vpack.c.bf16 %v221, %v219
      %v270 = vpack.c.bf16 %v222, %v220
      %v271 = vpack.c.bf16 %v225, %v223
      %v272 = vpack.c.bf16 %v226, %v224
      %v273 = vpack.c.bf16 %v229, %v227
      %v274 = vpack.c.bf16 %v230, %v228
      %v275 = vpack.c.bf16 %v233, %v231
      %v276 = vpack.c.bf16 %v234, %v232
      %v277 = vpack.c.bf16 %v237, %v235
      %v278 = vpack.c.bf16 %v238, %v236
      %v279 = vpack.c.bf16 %v241, %v239
      %v280 = vpack.c.bf16 %v242, %v240
      %v281 = vpack.c.bf16 %v245, %v243
      %v282 = vpack.c.bf16 %v246, %v244
      %v283 = vpack.c.bf16 %v249, %v247
      %v284 = vpack.c.bf16 %v250, %v248
      %v285 = vpack.c.bf16 %v253, %v251
      %v286 = vpack.c.bf16 %v254, %v252
      %v287 = vld [vmem:[%s3] sm:$0xf]
      %v288 = vld [vmem:[%s3 + $0x4] sm:$0xf]
      %v289 = vld [vmem:[%s3 + $0x8] sm:$0xf]
      %v290 = vld [vmem:[%s3 + $0xc] sm:$0xf]
      %v291 = vld [vmem:[%s3 + $0x10] sm:$0xf]
      %v292 = vld [vmem:[%s3 + $0x14] sm:$0xf]
      %v293 = vld [vmem:[%s3 + $0x18] sm:$0xf]
      %v294 = vld [vmem:[%s3 + $0x1c] sm:$0xf]
      %v295 = vld [vmem:[%s3 + $0x20] sm:$0xf]
      %v296 = vld [vmem:[%s3 + $0x24] sm:$0xf]
      %v297 = vld [vmem:[%s3 + $0x28] sm:$0xf]
      %v298 = vld [vmem:[%s3 + $0x2c] sm:$0xf]
      %v299 = vld [vmem:[%s3 + $0x30] sm:$0xf]
      %v300 = vld [vmem:[%s3 + $0x34] sm:$0xf]
      %v301 = vld [vmem:[%s3 + $0x38] sm:$0xf]
      %v302 = vld [vmem:[%s3 + $0x3c] sm:$0xf]
      %v303 = vld [vmem:[%s3 + $0x40] sm:$0xf]
      %v304 = vld [vmem:[%s3 + $0x44] sm:$0xf]
      %v305 = vld [vmem:[%s3 + $0x48] sm:$0xf]
      %v306 = vld [vmem:[%s3 + $0x4c] sm:$0xf]
      %v307 = vld [vmem:[%s3 + $0x50] sm:$0xf]
      %v308 = vld [vmem:[%s3 + $0x54] sm:$0xf]
      %v309 = vld [vmem:[%s3 + $0x58] sm:$0xf]
      %v310 = vld [vmem:[%s3 + $0x5c] sm:$0xf]
      %v311 = vld [vmem:[%s3 + $0x60] sm:$0xf]
      %v312 = vld [vmem:[%s3 + $0x64] sm:$0xf]
      %v313 = vld [vmem:[%s3 + $0x68] sm:$0xf]
      %v314 = vld [vmem:[%s3 + $0x6c] sm:$0xf]
      %v315 = vld [vmem:[%s3 + $0x70] sm:$0xf]
      %v316 = vld [vmem:[%s3 + $0x74] sm:$0xf]
      %v317 = vld [vmem:[%s3 + $0x78] sm:$0xf]
      %v318 = vld [vmem:[%s3 + $0x7c] sm:$0xf]
      %v351 = vunpack.c.l.b16 %v287
      %v352 = vunpack.c.l.b16 %v288
      %v353 = vunpack.c.l.b16 %v289
      %v354 = vunpack.c.l.b16 %v290
      %v355 = vunpack.c.l.b16 %v291
      %v356 = vunpack.c.l.b16 %v292
      %v357 = vunpack.c.l.b16 %v293
      %v358 = vunpack.c.l.b16 %v294
      %v359 = vunpack.c.l.b16 %v295
      %v360 = vunpack.c.l.b16 %v296
      %v361 = vunpack.c.l.b16 %v297
      %v362 = vunpack.c.l.b16 %v298
      %v363 = vunpack.c.l.b16 %v299
      %v364 = vunpack.c.l.b16 %v300
      %v365 = vunpack.c.l.b16 %v301
      %v366 = vunpack.c.l.b16 %v302
      %v367 = vunpack.c.l.b16 %v303
      %v368 = vunpack.c.l.b16 %v304
      %v369 = vunpack.c.l.b16 %v305
      %v370 = vunpack.c.l.b16 %v306
      %v371 = vunpack.c.l.b16 %v307
      %v372 = vunpack.c.l.b16 %v308
      %v373 = vunpack.c.l.b16 %v309
      %v374 = vunpack.c.l.b16 %v310
      %v375 = vunpack.c.l.b16 %v311
      %v376 = vunpack.c.l.b16 %v312
      %v377 = vunpack.c.l.b16 %v313
      %v378 = vunpack.c.l.b16 %v314
      %v379 = vunpack.c.l.b16 %v315
      %v380 = vunpack.c.l.b16 %v316
      %v381 = vunpack.c.l.b16 %v317
      %v382 = vunpack.c.l.b16 %v318
      %v383 = vpack.c.b16 %v352, %v351
      %v384 = vpack.c.b16 %v354, %v353
      %v385 = vpack.c.b16 %v356, %v355
      %v386 = vpack.c.b16 %v358, %v357
      %v387 = vpack.c.b16 %v360, %v359
      %v388 = vpack.c.b16 %v362, %v361
      %v389 = vpack.c.b16 %v364, %v363
      %v390 = vpack.c.b16 %v366, %v365
      %v391 = vpack.c.b16 %v368, %v367
      %v392 = vpack.c.b16 %v370, %v369
      %v393 = vpack.c.b16 %v372, %v371
      %v394 = vpack.c.b16 %v374, %v373
      %v395 = vpack.c.b16 %v376, %v375
      %v396 = vpack.c.b16 %v378, %v377
      %v397 = vpack.c.b16 %v380, %v379
      %v398 = vpack.c.b16 %v382, %v381
      %415 = vmatprep.subr.bf16.mxu0 0
      %416 = vmatpush1.bf16.msra.mxu0 %v390
      %417 = vmatprep.subr.bf16.mxu0 0
      %418 = vmatpush1.bf16.msra.mxu0 %v389
      %419 = vmatprep.subr.bf16.mxu0 0
      %420 = vmatpush1.bf16.msra.mxu0 %v388
      %421 = vmatprep.subr.bf16.mxu0 0
      %422 = vmatpush1.bf16.msra.mxu0 %v387
      %423 = vmatprep.subr.bf16.mxu0 0
      %424 = vmatpush1.bf16.msra.mxu0 %v386
      %425 = vmatprep.subr.bf16.mxu0 0
      %426 = vmatpush1.bf16.msra.mxu0 %v385
      %427 = vmatprep.subr.bf16.mxu0 0
      %428 = vmatpush1.bf16.msra.mxu0 %v384
      %429 = vmatprep.subr.bf16.mxu0 0
      %430 = vmatpush1.bf16.msra.mxu0 %v383
      %431 = vmatprep.subr.bf16.mxu0 0
      %432 = vmatpush2.bf16.msra.mxu0 %v398
      %433 = vmatprep.subr.bf16.mxu0 0
      %434 = vmatpush2.bf16.msra.mxu0 %v397
      %435 = vmatprep.subr.bf16.mxu0 0
      %436 = vmatpush2.bf16.msra.mxu0 %v396
      %437 = vmatprep.subr.bf16.mxu0 0
      %438 = vmatpush2.bf16.msra.mxu0 %v395
      %439 = vmatprep.subr.bf16.mxu0 0
      %440 = vmatpush2.bf16.msra.mxu0 %v394
      %441 = vmatprep.subr.bf16.mxu0 0
      %442 = vmatpush2.bf16.msra.mxu0 %v393
      %443 = vmatprep.subr.bf16.mxu0 0
      %444 = vmatpush2.bf16.msra.mxu0 %v392
      %445 = vmatprep.subr.bf16.mxu0 0
      %446 = vmatpush2.bf16.msra.mxu0 %v391
      %447 = vmatprep.mubr.bf16.mxu0 %v256
      %448 = vmatmul.mubr.bf16.gmra.mxu0 %v255
      %v449 = vpop.f32.mrf.mxu0
      %v450 = vadd.f32 0.0, %v449
      %v451 = vpop.f32.mrf.mxu0
      %v452 = vpop.f32.mrf.mxu0
      %v453 = vadd.f32 0.0, %v452
      %v454 = vpop.f32.mrf.mxu0
      %455 = vmatprep.mubr.bf16.mxu0 %v258
      %456 = vmatmul.mubr.bf16.gmra.mxu0 %v257
      %v457 = vpop.f32.mrf.mxu0
      %v458 = vadd.f32 0.0, %v457
      %v459 = vpop.f32.mrf.mxu0
      %v460 = vpop.f32.mrf.mxu0
      %v461 = vadd.f32 0.0, %v460
      %v462 = vpop.f32.mrf.mxu0
      %463 = vmatprep.mubr.bf16.mxu0 %v260
      %464 = vmatmul.mubr.bf16.gmra.mxu0 %v259
      %v465 = vpop.f32.mrf.mxu0
      %v466 = vadd.f32 0.0, %v465
      %v467 = vpop.f32.mrf.mxu0
      %v468 = vpop.f32.mrf.mxu0
      %v469 = vadd.f32 0.0, %v468
      %v470 = vpop.f32.mrf.mxu0
      %471 = vmatprep.mubr.bf16.mxu0 %v262
      %472 = vmatmul.mubr.bf16.gmra.mxu0 %v261
      %v473 = vpop.f32.mrf.mxu0
      %v474 = vadd.f32 0.0, %v473
      %v475 = vpop.f32.mrf.mxu0
      %v476 = vpop.f32.mrf.mxu0
      %v477 = vadd.f32 0.0, %v476
      %v478 = vpop.f32.mrf.mxu0
      %479 = vmatprep.mubr.bf16.mxu0 %v264
      %480 = vmatmul.mubr.bf16.gmra.mxu0 %v263
      %v481 = vpop.f32.mrf.mxu0
      %v482 = vadd.f32 0.0, %v481
      %v483 = vpop.f32.mrf.mxu0
      %v484 = vpop.f32.mrf.mxu0
      %v485 = vadd.f32 0.0, %v484
      %v486 = vpop.f32.mrf.mxu0
      %487 = vmatprep.mubr.bf16.mxu0 %v266
      %488 = vmatmul.mubr.bf16.gmra.mxu0 %v265
      %v489 = vpop.f32.mrf.mxu0
      %v490 = vadd.f32 0.0, %v489
      %v491 = vpop.f32.mrf.mxu0
      %v492 = vpop.f32.mrf.mxu0
      %v493 = vadd.f32 0.0, %v492
      %v494 = vpop.f32.mrf.mxu0
      %495 = vmatprep.mubr.bf16.mxu0 %v268
      %496 = vmatmul.mubr.bf16.gmra.mxu0 %v267
      %v497 = vpop.f32.mrf.mxu0
      %v498 = vadd.f32 0.0, %v497
      %v499 = vpop.f32.mrf.mxu0
      %v500 = vpop.f32.mrf.mxu0
      %v501 = vadd.f32 0.0, %v500
      %v502 = vpop.f32.mrf.mxu0
      %503 = vmatprep.mubr.bf16.mxu0 %v270
      %504 = vmatmul.mubr.bf16.gmra.mxu0 %v269
      %v505 = vpop.f32.mrf.mxu0
      %v506 = vadd.f32 0.0, %v505
      %v507 = vpop.f32.mrf.mxu0
      %v508 = vpop.f32.mrf.mxu0
      %v509 = vadd.f32 0.0, %v508
      %v510 = vpop.f32.mrf.mxu0
      %511 = vmatprep.mubr.bf16.mxu0 %v272
      %512 = vmatmul.mubr.bf16.gmra.mxu0 %v271
      %v513 = vpop.f32.mrf.mxu0
      %v514 = vadd.f32 0.0, %v513
      %v515 = vpop.f32.mrf.mxu0
      %v516 = vpop.f32.mrf.mxu0
      %v517 = vadd.f32 0.0, %v516
      %v518 = vpop.f32.mrf.mxu0
      %519 = vmatprep.mubr.bf16.mxu0 %v274
      %520 = vmatmul.mubr.bf16.gmra.mxu0 %v273
      %v521 = vpop.f32.mrf.mxu0
      %v522 = vadd.f32 0.0, %v521
      %v523 = vpop.f32.mrf.mxu0
      %v524 = vpop.f32.mrf.mxu0
      %v525 = vadd.f32 0.0, %v524
      %v526 = vpop.f32.mrf.mxu0
      %527 = vmatprep.mubr.bf16.mxu0 %v276
      %528 = vmatmul.mubr.bf16.gmra.mxu0 %v275
      %v529 = vpop.f32.mrf.mxu0
      %v530 = vadd.f32 0.0, %v529
      %v531 = vpop.f32.mrf.mxu0
      %v532 = vpop.f32.mrf.mxu0
      %v533 = vadd.f32 0.0, %v532
      %v534 = vpop.f32.mrf.mxu0
      %535 = vmatprep.mubr.bf16.mxu0 %v278
      %536 = vmatmul.mubr.bf16.gmra.mxu0 %v277
      %v537 = vpop.f32.mrf.mxu0
      %v538 = vadd.f32 0.0, %v537
      %v539 = vpop.f32.mrf.mxu0
      %v540 = vpop.f32.mrf.mxu0
      %v541 = vadd.f32 0.0, %v540
      %v542 = vpop.f32.mrf.mxu0
      %543 = vmatprep.mubr.bf16.mxu0 %v280
      %544 = vmatmul.mubr.bf16.gmra.mxu0 %v279
      %v545 = vpop.f32.mrf.mxu0
      %v546 = vadd.f32 0.0, %v545
      %v547 = vpop.f32.mrf.mxu0
      %v548 = vpop.f32.mrf.mxu0
      %v549 = vadd.f32 0.0, %v548
      %v550 = vpop.f32.mrf.mxu0
      %551 = vmatprep.mubr.bf16.mxu0 %v282
      %552 = vmatmul.mubr.bf16.gmra.mxu0 %v281
      %v553 = vpop.f32.mrf.mxu0
      %v554 = vadd.f32 0.0, %v553
      %v555 = vpop.f32.mrf.mxu0
      %v556 = vpop.f32.mrf.mxu0
      %v557 = vadd.f32 0.0, %v556
      %v558 = vpop.f32.mrf.mxu0
      %559 = vmatprep.mubr.bf16.mxu0 %v284
      %560 = vmatmul.mubr.bf16.gmra.mxu0 %v283
      %v561 = vpop.f32.mrf.mxu0
      %v562 = vadd.f32 0.0, %v561
      %v563 = vpop.f32.mrf.mxu0
      %v564 = vpop.f32.mrf.mxu0
      %v565 = vadd.f32 0.0, %v564
      %v566 = vpop.f32.mrf.mxu0
      %567 = vmatprep.mubr.bf16.mxu0 %v286
      %568 = vmatmul.mubr.bf16.gmra.mxu0 %v285
      %v569 = vpop.f32.mrf.mxu0
      %v570 = vadd.f32 0.0, %v569
      %v571 = vpop.f32.mrf.mxu0
      %v572 = vpop.f32.mrf.mxu0
      %v573 = vadd.f32 0.0, %v572
      %v574 = vpop.f32.mrf.mxu0
      %575 = vdwg.mxu0
      %576 = vst [vmem:[#allocation2] sm:$0xff] %v450
      %577 = vst [vmem:[#allocation2 + $0x8] sm:$0xff] %v453
      %578 = vst [vmem:[#allocation2 + $0x10] sm:$0xff] %v458
      %579 = vst [vmem:[#allocation2 + $0x18] sm:$0xff] %v461
      %580 = vst [vmem:[#allocation2 + $0x20] sm:$0xff] %v466
      %581 = vst [vmem:[#allocation2 + $0x28] sm:$0xff] %v469
      %582 = vst [vmem:[#allocation2 + $0x30] sm:$0xff] %v474
      %583 = vst [vmem:[#allocation2 + $0x38] sm:$0xff] %v477
      %584 = vst [vmem:[#allocation2 + $0x40] sm:$0xff] %v482
      %585 = vst [vmem:[#allocation2 + $0x48] sm:$0xff] %v485
      %586 = vst [vmem:[#allocation2 + $0x50] sm:$0xff] %v490
      %587 = vst [vmem:[#allocation2 + $0x58] sm:$0xff] %v493
      %588 = vst [vmem:[#allocation2 + $0x60] sm:$0xff] %v498
      %589 = vst [vmem:[#allocation2 + $0x68] sm:$0xff] %v501
      %590 = vst [vmem:[#allocation2 + $0x70] sm:$0xff] %v506
      %591 = vst [vmem:[#allocation2 + $0x78] sm:$0xff] %v509
      %592 = vst [vmem:[#allocation2 + $0x80] sm:$0xff] %v514
      %593 = vst [vmem:[#allocation2 + $0x88] sm:$0xff] %v517
      %594 = vst [vmem:[#allocation2 + $0x90] sm:$0xff] %v522
      %595 = vst [vmem:[#allocation2 + $0x98] sm:$0xff] %v525
      %596 = vst [vmem:[#allocation2 + $0xa0] sm:$0xff] %v530
      %597 = vst [vmem:[#allocation2 + $0xa8] sm:$0xff] %v533
      %598 = vst [vmem:[#allocation2 + $0xb0] sm:$0xff] %v538
      %599 = vst [vmem:[#allocation2 + $0xb8] sm:$0xff] %v541
      %600 = vst [vmem:[#allocation2 + $0xc0] sm:$0xff] %v546
      %601 = vst [vmem:[#allocation2 + $0xc8] sm:$0xff] %v549
      %602 = vst [vmem:[#allocation2 + $0xd0] sm:$0xff] %v554
      %603 = vst [vmem:[#allocation2 + $0xd8] sm:$0xff] %v557
      %604 = vst [vmem:[#allocation2 + $0xe0] sm:$0xff] %v562
      %605 = vst [vmem:[#allocation2 + $0xe8] sm:$0xff] %v565
      %606 = vst [vmem:[#allocation2 + $0xf0] sm:$0xff] %v570
      %607 = vst [vmem:[#allocation2 + $0xf8] sm:$0xff] %v573
      %s608 = sld [smem:[#allocation5 + %s26]]
      %s609 = sadd.s32 %s26, 1
      %s610 = sld [smem:[#allocation5 + %s609]]
      // While loop
      $region33: #{gunpool_block_forward.4} parent=31 // loop_pre_header
        _
      $region34: #{gunpool_block_forward.4} parent=31 // loop_header
        %s612 = sphi %s608, %s614
        %p613 = scmp.ge.s32.totalorder %s612, %s610
      $region35: #{gunpool_block_forward.4} parent=31 // loop_header_branch
        %616 = sbr.rel (%p613) target = $region39
      $region36: #{gunpool_block_forward.4} parent=31 // loop_body
        %s617 = sld [smem:[#allocation4 + %s612]]
        %s618 = ssub.s32 %s617, %s190
        %s619 = scalar_lea.vmem [#allocation2], %s618
        %v620 = vld [vmem:[%s619] sm:$0x1]
        %s621 = scalar_lea.vmem %s4, %s612
        %v622 = vld [vmem:[%s621] sm:$0x1]
        %v623 = vadd.f32 %v620, %v622
        %624 = vst [vmem:[%s619] sm:$0x1] %v623
      $region37: #{gunpool_block_forward.4} parent=31 // loop_footer
        %s614 = sadd.s32 %s612, 1
      $region38: #{gunpool_block_forward.4} parent=31 // loop_footer_branch
        %611 = sbr.rel target = $region34
      $region39: #{gunpool_block_forward.4} parent=31 // loop_exit
        _
      %v625 = vld [vmem:[#allocation2] sm:$0xff]
      %v626 = vld [vmem:[#allocation2 + $0x8] sm:$0xff]
      %v627 = vld [vmem:[#allocation2 + $0x10] sm:$0xff]
      %v628 = vld [vmem:[#allocation2 + $0x18] sm:$0xff]
      %v629 = vld [vmem:[#allocation2 + $0x20] sm:$0xff]
      %v630 = vld [vmem:[#allocation2 + $0x28] sm:$0xff]
      %v631 = vld [vmem:[#allocation2 + $0x30] sm:$0xff]
      %v632 = vld [vmem:[#allocation2 + $0x38] sm:$0xff]
      %v633 = vld [vmem:[#allocation2 + $0x40] sm:$0xff]
      %v634 = vld [vmem:[#allocation2 + $0x48] sm:$0xff]
      %v635 = vld [vmem:[#allocation2 + $0x50] sm:$0xff]
      %v636 = vld [vmem:[#allocation2 + $0x58] sm:$0xff]
      %v637 = vld [vmem:[#allocation2 + $0x60] sm:$0xff]
      %v638 = vld [vmem:[#allocation2 + $0x68] sm:$0xff]
      %v639 = vld [vmem:[#allocation2 + $0x70] sm:$0xff]
      %v640 = vld [vmem:[#allocation2 + $0x78] sm:$0xff]
      %v641 = vld [vmem:[#allocation2 + $0x80] sm:$0xff]
      %v642 = vld [vmem:[#allocation2 + $0x88] sm:$0xff]
      %v643 = vld [vmem:[#allocation2 + $0x90] sm:$0xff]
      %v644 = vld [vmem:[#allocation2 + $0x98] sm:$0xff]
      %v645 = vld [vmem:[#allocation2 + $0xa0] sm:$0xff]
      %v646 = vld [vmem:[#allocation2 + $0xa8] sm:$0xff]
      %v647 = vld [vmem:[#allocation2 + $0xb0] sm:$0xff]
      %v648 = vld [vmem:[#allocation2 + $0xb8] sm:$0xff]
      %v649 = vld [vmem:[#allocation2 + $0xc0] sm:$0xff]
      %v650 = vld [vmem:[#allocation2 + $0xc8] sm:$0xff]
      %v651 = vld [vmem:[#allocation2 + $0xd0] sm:$0xff]
      %v652 = vld [vmem:[#allocation2 + $0xd8] sm:$0xff]
      %v653 = vld [vmem:[#allocation2 + $0xe0] sm:$0xff]
      %v654 = vld [vmem:[#allocation2 + $0xe8] sm:$0xff]
      %v655 = vld [vmem:[#allocation2 + $0xf0] sm:$0xff]
      %v656 = vld [vmem:[#allocation2 + $0xf8] sm:$0xff]
      %v657 = vpack.c.bf16 %v626, %v625
      %v658 = vpack.c.bf16 %v628, %v627
      %v659 = vpack.c.bf16 %v630, %v629
      %v660 = vpack.c.bf16 %v632, %v631
      %v661 = vpack.c.bf16 %v634, %v633
      %v662 = vpack.c.bf16 %v636, %v635
      %v663 = vpack.c.bf16 %v638, %v637
      %v664 = vpack.c.bf16 %v640, %v639
      %v665 = vpack.c.bf16 %v642, %v641
      %v666 = vpack.c.bf16 %v644, %v643
      %v667 = vpack.c.bf16 %v646, %v645
      %v668 = vpack.c.bf16 %v648, %v647
      %v669 = vpack.c.bf16 %v650, %v649
      %v670 = vpack.c.bf16 %v652, %v651
      %v671 = vpack.c.bf16 %v654, %v653
      %v672 = vpack.c.bf16 %v656, %v655
      %v689 = vunpack.c.l.b16 %v657
      %v690 = vunpack.c.h.b16 %v657
      %v691 = vunpack.c.l.b16 %v658
      %v692 = vunpack.c.h.b16 %v658
      %v693 = vunpack.c.l.b16 %v659
      %v694 = vunpack.c.h.b16 %v659
      %v695 = vunpack.c.l.b16 %v660
      %v696 = vunpack.c.h.b16 %v660
      %v697 = vunpack.c.l.b16 %v661
      %v698 = vunpack.c.h.b16 %v661
      %v699 = vunpack.c.l.b16 %v662
      %v700 = vunpack.c.h.b16 %v662
      %v701 = vunpack.c.l.b16 %v663
      %v702 = vunpack.c.h.b16 %v663
      %v703 = vunpack.c.l.b16 %v664
      %v704 = vunpack.c.h.b16 %v664
      %v705 = vunpack.c.l.b16 %v665
      %v706 = vunpack.c.h.b16 %v665
      %v707 = vunpack.c.l.b16 %v666
      %v708 = vunpack.c.h.b16 %v666
      %v709 = vunpack.c.l.b16 %v667
      %v710 = vunpack.c.h.b16 %v667
      %v711 = vunpack.c.l.b16 %v668
      %v712 = vunpack.c.h.b16 %v668
      %v713 = vunpack.c.l.b16 %v669
      %v714 = vunpack.c.h.b16 %v669
      %v715 = vunpack.c.l.b16 %v670
      %v716 = vunpack.c.h.b16 %v670
      %v717 = vunpack.c.l.b16 %v671
      %v718 = vunpack.c.h.b16 %v671
      %v719 = vunpack.c.l.b16 %v672
      %v720 = vunpack.c.h.b16 %v672
      %v721 = vpack.c.b16 %v689, %v689
      %v722 = vpack.c.b16 %v690, %v690
      %v723 = vpack.c.b16 %v691, %v691
      %v724 = vpack.c.b16 %v692, %v692
      %v725 = vpack.c.b16 %v693, %v693
      %v726 = vpack.c.b16 %v694, %v694
      %v727 = vpack.c.b16 %v695, %v695
      %v728 = vpack.c.b16 %v696, %v696
      %v729 = vpack.c.b16 %v697, %v697
      %v730 = vpack.c.b16 %v698, %v698
      %v731 = vpack.c.b16 %v699, %v699
      %v732 = vpack.c.b16 %v700, %v700
      %v733 = vpack.c.b16 %v701, %v701
      %v734 = vpack.c.b16 %v702, %v702
      %v735 = vpack.c.b16 %v703, %v703
      %v736 = vpack.c.b16 %v704, %v704
      %v737 = vpack.c.b16 %v705, %v705
      %v738 = vpack.c.b16 %v706, %v706
      %v739 = vpack.c.b16 %v707, %v707
      %v740 = vpack.c.b16 %v708, %v708
      %v741 = vpack.c.b16 %v709, %v709
      %v742 = vpack.c.b16 %v710, %v710
      %v743 = vpack.c.b16 %v711, %v711
      %v744 = vpack.c.b16 %v712, %v712
      %v745 = vpack.c.b16 %v713, %v713
      %v746 = vpack.c.b16 %v714, %v714
      %v747 = vpack.c.b16 %v715, %v715
      %v748 = vpack.c.b16 %v716, %v716
      %v749 = vpack.c.b16 %v717, %v717
      %v750 = vpack.c.b16 %v718, %v718
      %v751 = vpack.c.b16 %v719, %v719
      %v752 = vpack.c.b16 %v720, %v720
      %785 = vst [vmem:[%s187] sm:$0xf] %v721
      %786 = vst [vmem:[%s187 + $0x4] sm:$0xf] %v722
      %787 = vst [vmem:[%s187 + $0x8] sm:$0xf] %v723
      %788 = vst [vmem:[%s187 + $0xc] sm:$0xf] %v724
      %789 = vst [vmem:[%s187 + $0x10] sm:$0xf] %v725
      %790 = vst [vmem:[%s187 + $0x14] sm:$0xf] %v726
      %791 = vst [vmem:[%s187 + $0x18] sm:$0xf] %v727
      %792 = vst [vmem:[%s187 + $0x1c] sm:$0xf] %v728
      %793 = vst [vmem:[%s187 + $0x20] sm:$0xf] %v729
      %794 = vst [vmem:[%s187 + $0x24] sm:$0xf] %v730
      %795 = vst [vmem:[%s187 + $0x28] sm:$0xf] %v731
      %796 = vst [vmem:[%s187 + $0x2c] sm:$0xf] %v732
      %797 = vst [vmem:[%s187 + $0x30] sm:$0xf] %v733
      %798 = vst [vmem:[%s187 + $0x34] sm:$0xf] %v734
      %799 = vst [vmem:[%s187 + $0x38] sm:$0xf] %v735
      %800 = vst [vmem:[%s187 + $0x3c] sm:$0xf] %v736
      %801 = vst [vmem:[%s187 + $0x40] sm:$0xf] %v737
      %802 = vst [vmem:[%s187 + $0x44] sm:$0xf] %v738
      %803 = vst [vmem:[%s187 + $0x48] sm:$0xf] %v739
      %804 = vst [vmem:[%s187 + $0x4c] sm:$0xf] %v740
      %805 = vst [vmem:[%s187 + $0x50] sm:$0xf] %v741
      %806 = vst [vmem:[%s187 + $0x54] sm:$0xf] %v742
      %807 = vst [vmem:[%s187 + $0x58] sm:$0xf] %v743
      %808 = vst [vmem:[%s187 + $0x5c] sm:$0xf] %v744
      %809 = vst [vmem:[%s187 + $0x60] sm:$0xf] %v745
      %810 = vst [vmem:[%s187 + $0x64] sm:$0xf] %v746
      %811 = vst [vmem:[%s187 + $0x68] sm:$0xf] %v747
      %812 = vst [vmem:[%s187 + $0x6c] sm:$0xf] %v748
      %813 = vst [vmem:[%s187 + $0x70] sm:$0xf] %v749
      %814 = vst [vmem:[%s187 + $0x74] sm:$0xf] %v750
      %815 = vst [vmem:[%s187 + $0x78] sm:$0xf] %v751
      %816 = vst [vmem:[%s187 + $0x7c] sm:$0xf] %v752
      %s817 = smul.u32 32, %s26
      %p818 = scmp.lt.s32.totalorder %s817, 63
      %s819 = scalar_select %p818, %s817, 63
      %s820 = smul.addr %s819, 4
      %s821 = scalar_lea.vmem %s5, %s820
      // Predicated region
      $region40: #{gunpool_block_forward.4} parent=31 // pred_check
        %p822 = pneg %p112
      $region41: #{gunpool_block_forward.4} parent=31 // pred_check_branch
        %824 = sbr.rel (%p822) target = $region43
      $region42: #{gunpool_block_forward.4} parent=31 // pred_region
        %s825 = smul.u32 32, %s26
      $region43: #{gunpool_block_forward.4} parent=31 // pred_fallthru
        _
    $region32: #{gunpool_block_forward.4} parent=5 // pred_fallthru
      _
    %p826 = scmp.le.s32.totalorder 2, %s21
    // Predicated region
    $region44: #{gunpool_block_forward.4} parent=5 // pred_check
      %p827 = pneg %p826
    $region45: #{gunpool_block_forward.4} parent=5 // pred_check_branch
      %829 = sbr.rel (%p827) target = $region47
    $region46: #{gunpool_block_forward.4} parent=5 // pred_region
      %s830 = ssub.s32 %s21, 2
      // Predicated region
      $region48: #{gunpool_block_forward.4} parent=46 // pred_check
        %p831 = pneg %p118
      $region49: #{gunpool_block_forward.4} parent=46 // pred_check_branch
        %833 = sbr.rel (%p831) target = $region51
      $region50: #{gunpool_block_forward.4} parent=46 // pred_region
        %s834 = smul.u32 32, %s27
        %p835 = scmp.lt.s32.totalorder %s834, 63
        %s836 = scalar_select %p835, %s834, 63
        %s837 = smul.addr %s836, 4
        %s838 = scalar_lea.vmem %s5, %s837
      $region51: #{gunpool_block_forward.4} parent=46 // pred_fallthru
        _
    $region47: #{gunpool_block_forward.4} parent=5 // pred_fallthru
      _
  $region6: #{gunpool_block_forward.4} parent=0 // loop_footer
    %s25 = sadd.s32 1, %s21
  $region7: #{gunpool_block_forward.4} parent=0 // loop_footer_branch
    %20 = sbr.rel target = $region3
  $region8: #{gunpool_block_forward.4} parent=0 // loop_exit
    _

// kernel: gunpool_block_forward.5
$region0: #{gunpool_block_forward.5}
  #allocation0 [shape = 'u32[]', space=smem, size = 0x4, offset = 0x4, fixed_abs, tag = 'smem constant byte address 0x4 - core index']
  #allocation1 [shape = 'u32[144,128]{1,0:T(1,128)}', space=vmem, size = 0x12000, scoped, tag = 'internal scratch']
  #allocation2 [shape = 'f32[256,128]{1,0:T(8,128)}', space=vmem, size = 0x20000, scoped, tag = 'scratch operand']
  %s0 = inlined_call_operand.vmem [shape: f32[512,512], index: 0, kind: input, shape index: {}]
  %s1 = inlined_call_operand.vmem [shape: bf16[512,128], index: 1, kind: input, shape index: {}]
  %s2 = inlined_call_operand.hbm [shape: f32[512,128], index: 2, kind: output, shape index: {}]
  %s3 = sld [smem:[#allocation0]]
  $region49: #{gunpool_block_forward.5} parent=0
    _
  %s5 = ssub.s32 1, %s3
  %s6 = scalar_select 0, %s5, %s3
  $region1: #{gunpool_block_forward.5} parent=0
    #allocation3 [shape = 'u8[262144]{0}', space=vmem, size = 0x40000, scoped, tag = 'output window, operand 0']
    #allocation4 [shape = 's32[2]{0}', space=sflag, size = 0x8, scoped, tag = 'scoped memory for gunpool_block_forward.5']
    %7 = vsyncpa [#allocation4], 0
    %s8 = scalar_lea.sflag [#allocation4], 1
    %9 = vsyncpa %s8, 0
    loop: start=0, step=1, limit=4
    $region2: #{gunpool_block_forward.5} parent=1 // loop_pre_header
      _
    $region3: #{gunpool_block_forward.5} parent=1 // loop_header
      %s11 = sphi 0, %s15
      %p12 = scmp.ge.s32.totalorder %s11, 4
      %s18 = sphi 0, %s30
      %s19 = sphi 0, %s26
      %s20 = sphi 0, %s18
      %s21 = sphi 0, %s19
      %s22 = sphi 0, %s20
      %s23 = sphi 0, %s21
      %s35 = sphi 0, %s37
      %s38 = sphi 0, %s35
      %s39 = sphi 0, %s38
      %s55 = sphi 0, %s39
      %s61 = sphi 0, %s63
      %s64 = sphi 0, %s61
      %s65 = sphi 0, %s64
      %s81 = sphi 0, %s65
      %s87 = sphi 0, %s89
      %s90 = sphi 0, %s87
      %s91 = sphi 0, %s90
      %s107 = sphi 0, %s91
    $region4: #{gunpool_block_forward.5} parent=1 // loop_header_branch
      %14 = sbr.rel (%p12) target = $region8
    $region5: #{gunpool_block_forward.5} parent=1 // loop_body
      %s16 = ssub.s32 %s11, 1
      %s17 = ssub.s32 %s11, 2
      %s24 = sadd.s32 1, %s19
      %p25 = scmp.ge.s32.totalorder %s24, 1
      %s26 = scalar_select %p25, 0, %s24
      %s27 = sadd.s32 1, %s18
      %s28 = scalar_select %p25, %s27, %s18
      %p29 = scmp.ge.s32.totalorder %s28, 2
      %s30 = scalar_select %p29, 0, %s28
      %s31 = ssub.s32 %s18, %s30
      %s32 = ssub.s32 %s19, %s26
      %s33 = sor.u32 %s31, %s32
      %p34 = scmp.eq.s32.totalorder %s33, 0
      %s36 = sadd.s32 %s35, 1
      %s37 = scalar_select %p34, %s35, %s36
      %p40 = pneg %p34
      %p41 = scmp.eq.s32.totalorder %s11, 1
      %p42 = por %p40, %p41
      %p43 = scmp.ne.s32.totalorder %s35, %s38
      %p44 = scmp.eq.s32.totalorder %s11, 0
      %p45 = por %p43, %p44
      %p46 = scmp.ne.s32.totalorder %s35, %s38
      %p47 = scmp.eq.s32.totalorder %s16, 1
      %p48 = por %p46, %p47
      %p49 = scmp.ne.s32.totalorder %s38, %s39
      %p50 = scmp.eq.s32.totalorder %s16, 0
      %p51 = por %p49, %p50
      %p52 = scmp.ne.s32.totalorder %s38, %s39
      %p53 = scmp.eq.s32.totalorder %s17, 1
      %p54 = por %p52, %p53
      %p56 = scmp.ne.s32.totalorder %s39, %s55
      %p57 = scmp.eq.s32.totalorder %s17, 0
      %p58 = por %p56, %p57
      %s59 = ssub.s32 %s19, %s26
      %p60 = scmp.eq.s32.totalorder %s59, 0
      %s62 = sadd.s32 %s61, 1
      %s63 = scalar_select %p60, %s61, %s62
      %p66 = pneg %p60
      %p67 = scmp.eq.s32.totalorder %s11, 1
      %p68 = por %p66, %p67
      %p69 = scmp.ne.s32.totalorder %s61, %s64
      %p70 = scmp.eq.s32.totalorder %s11, 0
      %p71 = por %p69, %p70
      %p72 = scmp.ne.s32.totalorder %s61, %s64
      %p73 = scmp.eq.s32.totalorder %s16, 1
      %p74 = por %p72, %p73
      %p75 = scmp.ne.s32.totalorder %s64, %s65
      %p76 = scmp.eq.s32.totalorder %s16, 0
      %p77 = por %p75, %p76
      %p78 = scmp.ne.s32.totalorder %s64, %s65
      %p79 = scmp.eq.s32.totalorder %s17, 1
      %p80 = por %p78, %p79
      %p82 = scmp.ne.s32.totalorder %s65, %s81
      %p83 = scmp.eq.s32.totalorder %s17, 0
      %p84 = por %p82, %p83
      %s85 = ssub.s32 %s18, %s30
      %p86 = scmp.eq.s32.totalorder %s85, 0
      %s88 = sadd.s32 %s87, 1
      %s89 = scalar_select %p86, %s87, %s88
      %p92 = pneg %p86
      %p93 = scmp.eq.s32.totalorder %s11, 1
      %p94 = por %p92, %p93
      %p95 = scmp.ne.s32.totalorder %s87, %s90
      %p96 = scmp.eq.s32.totalorder %s11, 0
      %p97 = por %p95, %p96
      %p98 = scmp.ne.s32.totalorder %s87, %s90
      %p99 = scmp.eq.s32.totalorder %s16, 1
      %p100 = por %p98, %p99
      %p101 = scmp.ne.s32.totalorder %s90, %s91
      %p102 = scmp.eq.s32.totalorder %s16, 0
      %p103 = por %p101, %p102
      %p104 = scmp.ne.s32.totalorder %s90, %s91
      %p105 = scmp.eq.s32.totalorder %s17, 1
      %p106 = por %p104, %p105
      %p108 = scmp.ne.s32.totalorder %s91, %s107
      %p109 = scmp.eq.s32.totalorder %s17, 0
      %p110 = por %p108, %p109
      %p111 = scmp.le.s32.totalorder 1, %s11
      %p112 = scmp.lt.s32.totalorder %s11, 3
      %p113 = pnand %p111, %p112
      %p114 = pneg %p113
      // Predicated region
      $region9: #{gunpool_block_forward.5} parent=5 // pred_check
        _
      $region10: #{gunpool_block_forward.5} parent=5 // pred_check_branch
        %116 = sbr.rel (%p113) target = $region12
      $region11: #{gunpool_block_forward.5} parent=5 // pred_region
        %s117 = ssub.s32 %s11, 1
        // Predicated region
        $region13: #{gunpool_block_forward.5} parent=11 // pred_check
          %p118 = pneg %p77
        $region14: #{gunpool_block_forward.5} parent=11 // pred_check_branch
          %120 = sbr.rel (%p118) target = $region16
        $region15: #{gunpool_block_forward.5} parent=11 // pred_region
          %s121 = smul.u32 64, %s21
          %p122 = scmp.lt.s32.totalorder %s121, 63
          %s123 = scalar_select %p122, %s121, 63
          %s124 = smul.addr %s123, 4
          %s125 = scalar_lea.vmem %s1, %s124
          %s126 = smul.u32 64, %s21
        $region16: #{gunpool_block_forward.5} parent=11 // pred_fallthru
          _
      $region12: #{gunpool_block_forward.5} parent=5 // pred_fallthru
        _
      %p127 = scmp.lt.s32.totalorder %s11, 2
      // Predicated region
      $region17: #{gunpool_block_forward.5} parent=5 // pred_check
        %p128 = pneg %p127
      $region18: #{gunpool_block_forward.5} parent=5 // pred_check_branch
        %130 = sbr.rel (%p128) target = $region20
      $region19: #{gunpool_block_forward.5} parent=5 // pred_region
        // Predicated region
        $region21: #{gunpool_block_forward.5} parent=19 // pred_check
          %p131 = pneg %p45
        $region22: #{gunpool_block_forward.5} parent=19 // pred_check_branch
          %133 = sbr.rel (%p131) target = $region24
        $region23: #{gunpool_block_forward.5} parent=19 // pred_region
          %s134 = smul.u32 32, %s18
          %s135 = smul.u32 4, %s19
          %p136 = scmp.lt.s32.totalorder %s134, 63
          %s137 = scalar_select %p136, %s134, 63
          %p138 = scmp.lt.s32.totalorder %s135, 3
          %s139 = scalar_select %p138, %s135, 3
          %s140 = smul.addr %s137, 4
          %s141 = sadd.s32 %s139, %s140
          %s142 = smul.addr %s141, 8
          %s143 = scalar_lea.vmem %s0, %s142
          %s144 = smul.u32 32, %s18
          %s145 = smul.u32 4, %s19
        $region24: #{gunpool_block_forward.5} parent=19 // pred_fallthru
          _
      $region20: #{gunpool_block_forward.5} parent=5 // pred_fallthru
        _
      %p146 = scmp.le.s32.totalorder 1, %s11
      %p147 = scmp.lt.s32.totalorder %s11, 3
      %p148 = pnand %p146, %p147
      %p149 = pneg %p148
      // Predicated region
      $region25: #{gunpool_block_forward.5} parent=5 // pred_check
        _
      $region26: #{gunpool_block_forward.5} parent=5 // pred_check_branch
        %151 = sbr.rel (%p148) target = $region28
      $region27: #{gunpool_block_forward.5} parent=5 // pred_region
        %s152 = ssub.s32 %s11, 1
        %s153 = smul.u32 32, %s20
        %s154 = smul.u32 4, %s21
        %p155 = scmp.lt.s32.totalorder %s153, 63
        %s156 = scalar_select %p155, %s153, 63
        %p157 = scmp.lt.s32.totalorder %s154, 3
        %s158 = scalar_select %p157, %s154, 3
        %s159 = smul.addr %s156, 4
        %s160 = sadd.s32 %s158, %s159
        %s161 = smul.addr %s160, 8
        %s162 = scalar_lea.vmem %s0, %s161
        %p163 = pneg %p51
        %p164 = pneg %p48
        %s165 = smul.u32 64, %s21
        %p166 = scmp.lt.s32.totalorder %s165, 63
        %s167 = scalar_select %p166, %s165, 63
        %s168 = smul.addr %s167, 4
        %s169 = scalar_lea.vmem %s1, %s168
        %p170 = pneg %p77
        %p171 = pneg %p74
        %p172 = pneg %p103
        %p173 = pneg %p100
        %s174 = sand.u32 %s90, 1
        %s175 = scalar_lea.sflag [#allocation4], %s174
        %s176 = sand.u32 %s90, 1
        %s177 = smul.addr %s176, 256
        %s178 = scalar_lea.vmem [#allocation3], %s177
        %s179 = smul.u32 32, %s20
        %s180 = smul.u32 4, %s21
        %p181 = scmp.lt.s32.totalorder %s179, 63
        %s182 = scalar_select %p181, %s179, 63
        %p183 = scmp.lt.s32.totalorder %s180, 3
        %s184 = scalar_select %p183, %s180, 3
        %s185 = smul.addr %s182, 4
        %s186 = sadd.s32 %s184, %s185
        %s187 = smul.addr %s186, 8
        %s188 = scalar_lea.vmem %s0, %s187
        %s189 = smul.u32 32, %s20
        %s190 = smul.u32 4, %s21
        %s191 = smul.u32 64, %s21
        %p192 = scmp.lt.s32.totalorder %s191, 63
        %s193 = scalar_select %p192, %s191, 63
        %s194 = smul.addr %s193, 4
        %s195 = scalar_lea.vmem %s1, %s194
        %s196 = smul.u32 64, %s21
        %s197 = smul.u32 32, %s20
        %p199 = scmp.eq.s32.totalorder %s21, 0
        // Predicated region
        $region29: #{gunpool_block_forward.5} parent=27 // pred_check
          %p200 = pneg %p199
        $region30: #{gunpool_block_forward.5} parent=27 // pred_check_branch
          %202 = sbr.rel (%p200) target = $region32
        $region31: #{gunpool_block_forward.5} parent=27 // pred_region
          %203 = vst [vmem:[#allocation2] sm:$0xff] 0.0
          %204 = vst [vmem:[#allocation2 + $0x8] sm:$0xff] 0.0
          %205 = vst [vmem:[#allocation2 + $0x10] sm:$0xff] 0.0
          %206 = vst [vmem:[#allocation2 + $0x18] sm:$0xff] 0.0
          %207 = vst [vmem:[#allocation2 + $0x20] sm:$0xff] 0.0
          %208 = vst [vmem:[#allocation2 + $0x28] sm:$0xff] 0.0
          %209 = vst [vmem:[#allocation2 + $0x30] sm:$0xff] 0.0
          %210 = vst [vmem:[#allocation2 + $0x38] sm:$0xff] 0.0
          %211 = vst [vmem:[#allocation2 + $0x40] sm:$0xff] 0.0
          %212 = vst [vmem:[#allocation2 + $0x48] sm:$0xff] 0.0
          %213 = vst [vmem:[#allocation2 + $0x50] sm:$0xff] 0.0
          %214 = vst [vmem:[#allocation2 + $0x58] sm:$0xff] 0.0
          %215 = vst [vmem:[#allocation2 + $0x60] sm:$0xff] 0.0
          %216 = vst [vmem:[#allocation2 + $0x68] sm:$0xff] 0.0
          %217 = vst [vmem:[#allocation2 + $0x70] sm:$0xff] 0.0
          %218 = vst [vmem:[#allocation2 + $0x78] sm:$0xff] 0.0
          %219 = vst [vmem:[#allocation2 + $0x80] sm:$0xff] 0.0
          %220 = vst [vmem:[#allocation2 + $0x88] sm:$0xff] 0.0
          %221 = vst [vmem:[#allocation2 + $0x90] sm:$0xff] 0.0
          %222 = vst [vmem:[#allocation2 + $0x98] sm:$0xff] 0.0
          %223 = vst [vmem:[#allocation2 + $0xa0] sm:$0xff] 0.0
          %224 = vst [vmem:[#allocation2 + $0xa8] sm:$0xff] 0.0
          %225 = vst [vmem:[#allocation2 + $0xb0] sm:$0xff] 0.0
          %226 = vst [vmem:[#allocation2 + $0xb8] sm:$0xff] 0.0
          %227 = vst [vmem:[#allocation2 + $0xc0] sm:$0xff] 0.0
          %228 = vst [vmem:[#allocation2 + $0xc8] sm:$0xff] 0.0
          %229 = vst [vmem:[#allocation2 + $0xd0] sm:$0xff] 0.0
          %230 = vst [vmem:[#allocation2 + $0xd8] sm:$0xff] 0.0
          %231 = vst [vmem:[#allocation2 + $0xe0] sm:$0xff] 0.0
          %232 = vst [vmem:[#allocation2 + $0xe8] sm:$0xff] 0.0
          %233 = vst [vmem:[#allocation2 + $0xf0] sm:$0xff] 0.0
          %234 = vst [vmem:[#allocation2 + $0xf8] sm:$0xff] 0.0
        $region32: #{gunpool_block_forward.5} parent=27 // pred_fallthru
          _
        %v235 = vld [vmem:[#allocation2] sm:$0xff]
        %v236 = vld [vmem:[#allocation2 + $0x8] sm:$0xff]
        %v237 = vld [vmem:[#allocation2 + $0x10] sm:$0xff]
        %v238 = vld [vmem:[#allocation2 + $0x18] sm:$0xff]
        %v239 = vld [vmem:[#allocation2 + $0x20] sm:$0xff]
        %v240 = vld [vmem:[#allocation2 + $0x28] sm:$0xff]
        %v241 = vld [vmem:[#allocation2 + $0x30] sm:$0xff]
        %v242 = vld [vmem:[#allocation2 + $0x38] sm:$0xff]
        %v243 = vld [vmem:[#allocation2 + $0x40] sm:$0xff]
        %v244 = vld [vmem:[#allocation2 + $0x48] sm:$0xff]
        %v245 = vld [vmem:[#allocation2 + $0x50] sm:$0xff]
        %v246 = vld [vmem:[#allocation2 + $0x58] sm:$0xff]
        %v247 = vld [vmem:[#allocation2 + $0x60] sm:$0xff]
        %v248 = vld [vmem:[#allocation2 + $0x68] sm:$0xff]
        %v249 = vld [vmem:[#allocation2 + $0x70] sm:$0xff]
        %v250 = vld [vmem:[#allocation2 + $0x78] sm:$0xff]
        %v251 = vld [vmem:[#allocation2 + $0x80] sm:$0xff]
        %v252 = vld [vmem:[#allocation2 + $0x88] sm:$0xff]
        %v253 = vld [vmem:[#allocation2 + $0x90] sm:$0xff]
        %v254 = vld [vmem:[#allocation2 + $0x98] sm:$0xff]
        %v255 = vld [vmem:[#allocation2 + $0xa0] sm:$0xff]
        %v256 = vld [vmem:[#allocation2 + $0xa8] sm:$0xff]
        %v257 = vld [vmem:[#allocation2 + $0xb0] sm:$0xff]
        %v258 = vld [vmem:[#allocation2 + $0xb8] sm:$0xff]
        %v259 = vld [vmem:[#allocation2 + $0xc0] sm:$0xff]
        %v260 = vld [vmem:[#allocation2 + $0xc8] sm:$0xff]
        %v261 = vld [vmem:[#allocation2 + $0xd0] sm:$0xff]
        %v262 = vld [vmem:[#allocation2 + $0xd8] sm:$0xff]
        %v263 = vld [vmem:[#allocation2 + $0xe0] sm:$0xff]
        %v264 = vld [vmem:[#allocation2 + $0xe8] sm:$0xff]
        %v265 = vld [vmem:[#allocation2 + $0xf0] sm:$0xff]
        %v266 = vld [vmem:[#allocation2 + $0xf8] sm:$0xff]
        %v267 = vld [vmem:[%s188] sm:$0xff]
        %v268 = vld [vmem:[%s188 + $0x8] sm:$0xff]
        %v269 = vld [vmem:[%s188 + $0x10] sm:$0xff]
        %v270 = vld [vmem:[%s188 + $0x18] sm:$0xff]
        %v271 = vld [vmem:[%s188 + $0x20] sm:$0xff]
        %v272 = vld [vmem:[%s188 + $0x28] sm:$0xff]
        %v273 = vld [vmem:[%s188 + $0x30] sm:$0xff]
        %v274 = vld [vmem:[%s188 + $0x38] sm:$0xff]
        %v275 = vld [vmem:[%s188 + $0x40] sm:$0xff]
        %v276 = vld [vmem:[%s188 + $0x48] sm:$0xff]
        %v277 = vld [vmem:[%s188 + $0x50] sm:$0xff]
        %v278 = vld [vmem:[%s188 + $0x58] sm:$0xff]
        %v279 = vld [vmem:[%s188 + $0x60] sm:$0xff]
        %v280 = vld [vmem:[%s188 + $0x68] sm:$0xff]
        %v281 = vld [vmem:[%s188 + $0x70] sm:$0xff]
        %v282 = vld [vmem:[%s188 + $0x78] sm:$0xff]
        %v283 = vld [vmem:[%s188 + $0x80] sm:$0xff]
        %v284 = vld [vmem:[%s188 + $0x88] sm:$0xff]
        %v285 = vld [vmem:[%s188 + $0x90] sm:$0xff]
        %v286 = vld [vmem:[%s188 + $0x98] sm:$0xff]
        %v287 = vld [vmem:[%s188 + $0xa0] sm:$0xff]
        %v288 = vld [vmem:[%s188 + $0xa8] sm:$0xff]
        %v289 = vld [vmem:[%s188 + $0xb0] sm:$0xff]
        %v290 = vld [vmem:[%s188 + $0xb8] sm:$0xff]
        %v291 = vld [vmem:[%s188 + $0xc0] sm:$0xff]
        %v292 = vld [vmem:[%s188 + $0xc8] sm:$0xff]
        %v293 = vld [vmem:[%s188 + $0xd0] sm:$0xff]
        %v294 = vld [vmem:[%s188 + $0xd8] sm:$0xff]
        %v295 = vld [vmem:[%s188 + $0xe0] sm:$0xff]
        %v296 = vld [vmem:[%s188 + $0xe8] sm:$0xff]
        %v297 = vld [vmem:[%s188 + $0xf0] sm:$0xff]
        %v298 = vld [vmem:[%s188 + $0xf8] sm:$0xff]
        %v299 = vld [vmem:[%s188 + $0x100] sm:$0xff]
        %v300 = vld [vmem:[%s188 + $0x108] sm:$0xff]
        %v301 = vld [vmem:[%s188 + $0x110] sm:$0xff]
        %v302 = vld [vmem:[%s188 + $0x118] sm:$0xff]
        %v303 = vld [vmem:[%s188 + $0x120] sm:$0xff]
        %v304 = vld [vmem:[%s188 + $0x128] sm:$0xff]
        %v305 = vld [vmem:[%s188 + $0x130] sm:$0xff]
        %v306 = vld [vmem:[%s188 + $0x138] sm:$0xff]
        %v307 = vld [vmem:[%s188 + $0x140] sm:$0xff]
        %v308 = vld [vmem:[%s188 + $0x148] sm:$0xff]
        %v309 = vld [vmem:[%s188 + $0x150] sm:$0xff]
        %v310 = vld [vmem:[%s188 + $0x158] sm:$0xff]
        %v311 = vld [vmem:[%s188 + $0x160] sm:$0xff]
        %v312 = vld [vmem:[%s188 + $0x168] sm:$0xff]
        %v313 = vld [vmem:[%s188 + $0x170] sm:$0xff]
        %v314 = vld [vmem:[%s188 + $0x178] sm:$0xff]
        %v315 = vld [vmem:[%s188 + $0x180] sm:$0xff]
        %v316 = vld [vmem:[%s188 + $0x188] sm:$0xff]
        %v317 = vld [vmem:[%s188 + $0x190] sm:$0xff]
        %v318 = vld [vmem:[%s188 + $0x198] sm:$0xff]
        %v319 = vld [vmem:[%s188 + $0x1a0] sm:$0xff]
        %v320 = vld [vmem:[%s188 + $0x1a8] sm:$0xff]
        %v321 = vld [vmem:[%s188 + $0x1b0] sm:$0xff]
        %v322 = vld [vmem:[%s188 + $0x1b8] sm:$0xff]
        %v323 = vld [vmem:[%s188 + $0x1c0] sm:$0xff]
        %v324 = vld [vmem:[%s188 + $0x1c8] sm:$0xff]
        %v325 = vld [vmem:[%s188 + $0x1d0] sm:$0xff]
        %v326 = vld [vmem:[%s188 + $0x1d8] sm:$0xff]
        %v327 = vld [vmem:[%s188 + $0x1e0] sm:$0xff]
        %v328 = vld [vmem:[%s188 + $0x1e8] sm:$0xff]
        %v329 = vld [vmem:[%s188 + $0x1f0] sm:$0xff]
        %v330 = vld [vmem:[%s188 + $0x1f8] sm:$0xff]
        %v331 = vld [vmem:[%s188 + $0x200] sm:$0xff]
        %v332 = vld [vmem:[%s188 + $0x208] sm:$0xff]
        %v333 = vld [vmem:[%s188 + $0x210] sm:$0xff]
        %v334 = vld [vmem:[%s188 + $0x218] sm:$0xff]
        %v335 = vld [vmem:[%s188 + $0x220] sm:$0xff]
        %v336 = vld [vmem:[%s188 + $0x228] sm:$0xff]
        %v337 = vld [vmem:[%s188 + $0x230] sm:$0xff]
        %v338 = vld [vmem:[%s188 + $0x238] sm:$0xff]
        %v339 = vld [vmem:[%s188 + $0x240] sm:$0xff]
        %v340 = vld [vmem:[%s188 + $0x248] sm:$0xff]
        %v341 = vld [vmem:[%s188 + $0x250] sm:$0xff]
        %v342 = vld [vmem:[%s188 + $0x258] sm:$0xff]
        %v343 = vld [vmem:[%s188 + $0x260] sm:$0xff]
        %v344 = vld [vmem:[%s188 + $0x268] sm:$0xff]
        %v345 = vld [vmem:[%s188 + $0x270] sm:$0xff]
        %v346 = vld [vmem:[%s188 + $0x278] sm:$0xff]
        %v347 = vld [vmem:[%s188 + $0x280] sm:$0xff]
        %v348 = vld [vmem:[%s188 + $0x288] sm:$0xff]
        %v349 = vld [vmem:[%s188 + $0x290] sm:$0xff]
        %v350 = vld [vmem:[%s188 + $0x298] sm:$0xff]
        %v351 = vld [vmem:[%s188 + $0x2a0] sm:$0xff]
        %v352 = vld [vmem:[%s188 + $0x2a8] sm:$0xff]
        %v353 = vld [vmem:[%s188 + $0x2b0] sm:$0xff]
        %v354 = vld [vmem:[%s188 + $0x2b8] sm:$0xff]
        %v355 = vld [vmem:[%s188 + $0x2c0] sm:$0xff]
        %v356 = vld [vmem:[%s188 + $0x2c8] sm:$0xff]
        %v357 = vld [vmem:[%s188 + $0x2d0] sm:$0xff]
        %v358 = vld [vmem:[%s188 + $0x2d8] sm:$0xff]
        %v359 = vld [vmem:[%s188 + $0x2e0] sm:$0xff]
        %v360 = vld [vmem:[%s188 + $0x2e8] sm:$0xff]
        %v361 = vld [vmem:[%s188 + $0x2f0] sm:$0xff]
        %v362 = vld [vmem:[%s188 + $0x2f8] sm:$0xff]
        %v363 = vld [vmem:[%s188 + $0x300] sm:$0xff]
        %v364 = vld [vmem:[%s188 + $0x308] sm:$0xff]
        %v365 = vld [vmem:[%s188 + $0x310] sm:$0xff]
        %v366 = vld [vmem:[%s188 + $0x318] sm:$0xff]
        %v367 = vld [vmem:[%s188 + $0x320] sm:$0xff]
        %v368 = vld [vmem:[%s188 + $0x328] sm:$0xff]
        %v369 = vld [vmem:[%s188 + $0x330] sm:$0xff]
        %v370 = vld [vmem:[%s188 + $0x338] sm:$0xff]
        %v371 = vld [vmem:[%s188 + $0x340] sm:$0xff]
        %v372 = vld [vmem:[%s188 + $0x348] sm:$0xff]
        %v373 = vld [vmem:[%s188 + $0x350] sm:$0xff]
        %v374 = vld [vmem:[%s188 + $0x358] sm:$0xff]
        %v375 = vld [vmem:[%s188 + $0x360] sm:$0xff]
        %v376 = vld [vmem:[%s188 + $0x368] sm:$0xff]
        %v377 = vld [vmem:[%s188 + $0x370] sm:$0xff]
        %v378 = vld [vmem:[%s188 + $0x378] sm:$0xff]
        %v379 = vld [vmem:[%s188 + $0x380] sm:$0xff]
        %v380 = vld [vmem:[%s188 + $0x388] sm:$0xff]
        %v381 = vld [vmem:[%s188 + $0x390] sm:$0xff]
        %v382 = vld [vmem:[%s188 + $0x398] sm:$0xff]
        %v383 = vld [vmem:[%s188 + $0x3a0] sm:$0xff]
        %v384 = vld [vmem:[%s188 + $0x3a8] sm:$0xff]
        %v385 = vld [vmem:[%s188 + $0x3b0] sm:$0xff]
        %v386 = vld [vmem:[%s188 + $0x3b8] sm:$0xff]
        %v387 = vld [vmem:[%s188 + $0x3c0] sm:$0xff]
        %v388 = vld [vmem:[%s188 + $0x3c8] sm:$0xff]
        %v389 = vld [vmem:[%s188 + $0x3d0] sm:$0xff]
        %v390 = vld [vmem:[%s188 + $0x3d8] sm:$0xff]
        %v391 = vld [vmem:[%s188 + $0x3e0] sm:$0xff]
        %v392 = vld [vmem:[%s188 + $0x3e8] sm:$0xff]
        %v393 = vld [vmem:[%s188 + $0x3f0] sm:$0xff]
        %v394 = vld [vmem:[%s188 + $0x3f8] sm:$0xff]
        %v395 = vpack.c.bf16 %v271, %v267
        %v396 = vpack.c.bf16 %v272, %v268
        %v397 = vpack.c.bf16 %v273, %v269
        %v398 = vpack.c.bf16 %v274, %v270
        %v399 = vpack.c.bf16 %v279, %v275
        %v400 = vpack.c.bf16 %v280, %v276
        %v401 = vpack.c.bf16 %v281, %v277
        %v402 = vpack.c.bf16 %v282, %v278
        %v403 = vpack.c.bf16 %v287, %v283
        %v404 = vpack.c.bf16 %v288, %v284
        %v405 = vpack.c.bf16 %v289, %v285
        %v406 = vpack.c.bf16 %v290, %v286
        %v407 = vpack.c.bf16 %v295, %v291
        %v408 = vpack.c.bf16 %v296, %v292
        %v409 = vpack.c.bf16 %v297, %v293
        %v410 = vpack.c.bf16 %v298, %v294
        %v411 = vpack.c.bf16 %v303, %v299
        %v412 = vpack.c.bf16 %v304, %v300
        %v413 = vpack.c.bf16 %v305, %v301
        %v414 = vpack.c.bf16 %v306, %v302
        %v415 = vpack.c.bf16 %v311, %v307
        %v416 = vpack.c.bf16 %v312, %v308
        %v417 = vpack.c.bf16 %v313, %v309
        %v418 = vpack.c.bf16 %v314, %v310
        %v419 = vpack.c.bf16 %v319, %v315
        %v420 = vpack.c.bf16 %v320, %v316
        %v421 = vpack.c.bf16 %v321, %v317
        %v422 = vpack.c.bf16 %v322, %v318
        %v423 = vpack.c.bf16 %v327, %v323
        %v424 = vpack.c.bf16 %v328, %v324
        %v425 = vpack.c.bf16 %v329, %v325
        %v426 = vpack.c.bf16 %v330, %v326
        %v427 = vpack.c.bf16 %v335, %v331
        %v428 = vpack.c.bf16 %v336, %v332
        %v429 = vpack.c.bf16 %v337, %v333
        %v430 = vpack.c.bf16 %v338, %v334
        %v431 = vpack.c.bf16 %v343, %v339
        %v432 = vpack.c.bf16 %v344, %v340
        %v433 = vpack.c.bf16 %v345, %v341
        %v434 = vpack.c.bf16 %v346, %v342
        %v435 = vpack.c.bf16 %v351, %v347
        %v436 = vpack.c.bf16 %v352, %v348
        %v437 = vpack.c.bf16 %v353, %v349
        %v438 = vpack.c.bf16 %v354, %v350
        %v439 = vpack.c.bf16 %v359, %v355
        %v440 = vpack.c.bf16 %v360, %v356
        %v441 = vpack.c.bf16 %v361, %v357
        %v442 = vpack.c.bf16 %v362, %v358
        %v443 = vpack.c.bf16 %v367, %v363
        %v444 = vpack.c.bf16 %v368, %v364
        %v445 = vpack.c.bf16 %v369, %v365
        %v446 = vpack.c.bf16 %v370, %v366
        %v447 = vpack.c.bf16 %v375, %v371
        %v448 = vpack.c.bf16 %v376, %v372
        %v449 = vpack.c.bf16 %v377, %v373
        %v450 = vpack.c.bf16 %v378, %v374
        %v451 = vpack.c.bf16 %v383, %v379
        %v452 = vpack.c.bf16 %v384, %v380
        %v453 = vpack.c.bf16 %v385, %v381
        %v454 = vpack.c.bf16 %v386, %v382
        %v455 = vpack.c.bf16 %v391, %v387
        %v456 = vpack.c.bf16 %v392, %v388
        %v457 = vpack.c.bf16 %v393, %v389
        %v458 = vpack.c.bf16 %v394, %v390
        %v459 = vld [vmem:[%s195] sm:$0xf]
        %v460 = vld [vmem:[%s195 + $0x4] sm:$0xf]
        %v461 = vld [vmem:[%s195 + $0x8] sm:$0xf]
        %v462 = vld [vmem:[%s195 + $0xc] sm:$0xf]
        %v463 = vld [vmem:[%s195 + $0x10] sm:$0xf]
        %v464 = vld [vmem:[%s195 + $0x14] sm:$0xf]
        %v465 = vld [vmem:[%s195 + $0x18] sm:$0xf]
        %v466 = vld [vmem:[%s195 + $0x1c] sm:$0xf]
        %v467 = vld [vmem:[%s195 + $0x20] sm:$0xf]
        %v468 = vld [vmem:[%s195 + $0x24] sm:$0xf]
        %v469 = vld [vmem:[%s195 + $0x28] sm:$0xf]
        %v470 = vld [vmem:[%s195 + $0x2c] sm:$0xf]
        %v471 = vld [vmem:[%s195 + $0x30] sm:$0xf]
        %v472 = vld [vmem:[%s195 + $0x34] sm:$0xf]
        %v473 = vld [vmem:[%s195 + $0x38] sm:$0xf]
        %v474 = vld [vmem:[%s195 + $0x3c] sm:$0xf]
        %v475 = vld [vmem:[%s195 + $0x40] sm:$0xf]
        %v476 = vld [vmem:[%s195 + $0x44] sm:$0xf]
        %v477 = vld [vmem:[%s195 + $0x48] sm:$0xf]
        %v478 = vld [vmem:[%s195 + $0x4c] sm:$0xf]
        %v479 = vld [vmem:[%s195 + $0x50] sm:$0xf]
        %v480 = vld [vmem:[%s195 + $0x54] sm:$0xf]
        %v481 = vld [vmem:[%s195 + $0x58] sm:$0xf]
        %v482 = vld [vmem:[%s195 + $0x5c] sm:$0xf]
        %v483 = vld [vmem:[%s195 + $0x60] sm:$0xf]
        %v484 = vld [vmem:[%s195 + $0x64] sm:$0xf]
        %v485 = vld [vmem:[%s195 + $0x68] sm:$0xf]
        %v486 = vld [vmem:[%s195 + $0x6c] sm:$0xf]
        %v487 = vld [vmem:[%s195 + $0x70] sm:$0xf]
        %v488 = vld [vmem:[%s195 + $0x74] sm:$0xf]
        %v489 = vld [vmem:[%s195 + $0x78] sm:$0xf]
        %v490 = vld [vmem:[%s195 + $0x7c] sm:$0xf]
        %v491 = vld [vmem:[%s195 + $0x80] sm:$0xf]
        %v492 = vld [vmem:[%s195 + $0x84] sm:$0xf]
        %v493 = vld [vmem:[%s195 + $0x88] sm:$0xf]
        %v494 = vld [vmem:[%s195 + $0x8c] sm:$0xf]
        %v495 = vld [vmem:[%s195 + $0x90] sm:$0xf]
        %v496 = vld [vmem:[%s195 + $0x94] sm:$0xf]
        %v497 = vld [vmem:[%s195 + $0x98] sm:$0xf]
        %v498 = vld [vmem:[%s195 + $0x9c] sm:$0xf]
        %v499 = vld [vmem:[%s195 + $0xa0] sm:$0xf]
        %v500 = vld [vmem:[%s195 + $0xa4] sm:$0xf]
        %v501 = vld [vmem:[%s195 + $0xa8] sm:$0xf]
        %v502 = vld [vmem:[%s195 + $0xac] sm:$0xf]
        %v503 = vld [vmem:[%s195 + $0xb0] sm:$0xf]
        %v504 = vld [vmem:[%s195 + $0xb4] sm:$0xf]
        %v505 = vld [vmem:[%s195 + $0xb8] sm:$0xf]
        %v506 = vld [vmem:[%s195 + $0xbc] sm:$0xf]
        %v507 = vld [vmem:[%s195 + $0xc0] sm:$0xf]
        %v508 = vld [vmem:[%s195 + $0xc4] sm:$0xf]
        %v509 = vld [vmem:[%s195 + $0xc8] sm:$0xf]
        %v510 = vld [vmem:[%s195 + $0xcc] sm:$0xf]
        %v511 = vld [vmem:[%s195 + $0xd0] sm:$0xf]
        %v512 = vld [vmem:[%s195 + $0xd4] sm:$0xf]
        %v513 = vld [vmem:[%s195 + $0xd8] sm:$0xf]
        %v514 = vld [vmem:[%s195 + $0xdc] sm:$0xf]
        %v515 = vld [vmem:[%s195 + $0xe0] sm:$0xf]
        %v516 = vld [vmem:[%s195 + $0xe4] sm:$0xf]
        %v517 = vld [vmem:[%s195 + $0xe8] sm:$0xf]
        %v518 = vld [vmem:[%s195 + $0xec] sm:$0xf]
        %v519 = vld [vmem:[%s195 + $0xf0] sm:$0xf]
        %v520 = vld [vmem:[%s195 + $0xf4] sm:$0xf]
        %v521 = vld [vmem:[%s195 + $0xf8] sm:$0xf]
        %v522 = vld [vmem:[%s195 + $0xfc] sm:$0xf]
        %v587 = vunpack.c.l.b16 %v459
        %v588 = vunpack.c.l.b16 %v460
        %v589 = vunpack.c.l.b16 %v461
        %v590 = vunpack.c.l.b16 %v462
        %v591 = vunpack.c.l.b16 %v463
        %v592 = vunpack.c.l.b16 %v464
        %v593 = vunpack.c.l.b16 %v465
        %v594 = vunpack.c.l.b16 %v466
        %v595 = vunpack.c.l.b16 %v467
        %v596 = vunpack.c.l.b16 %v468
        %v597 = vunpack.c.l.b16 %v469
        %v598 = vunpack.c.l.b16 %v470
        %v599 = vunpack.c.l.b16 %v471
        %v600 = vunpack.c.l.b16 %v472
        %v601 = vunpack.c.l.b16 %v473
        %v602 = vunpack.c.l.b16 %v474
        %v603 = vunpack.c.l.b16 %v475
        %v604 = vunpack.c.l.b16 %v476
        %v605 = vunpack.c.l.b16 %v477
        %v606 = vunpack.c.l.b16 %v478
        %v607 = vunpack.c.l.b16 %v479
        %v608 = vunpack.c.l.b16 %v480
        %v609 = vunpack.c.l.b16 %v481
        %v610 = vunpack.c.l.b16 %v482
        %v611 = vunpack.c.l.b16 %v483
        %v612 = vunpack.c.l.b16 %v484
        %v613 = vunpack.c.l.b16 %v485
        %v614 = vunpack.c.l.b16 %v486
        %v615 = vunpack.c.l.b16 %v487
        %v616 = vunpack.c.l.b16 %v488
        %v617 = vunpack.c.l.b16 %v489
        %v618 = vunpack.c.l.b16 %v490
        %v619 = vunpack.c.l.b16 %v491
        %v620 = vunpack.c.l.b16 %v492
        %v621 = vunpack.c.l.b16 %v493
        %v622 = vunpack.c.l.b16 %v494
        %v623 = vunpack.c.l.b16 %v495
        %v624 = vunpack.c.l.b16 %v496
        %v625 = vunpack.c.l.b16 %v497
        %v626 = vunpack.c.l.b16 %v498
        %v627 = vunpack.c.l.b16 %v499
        %v628 = vunpack.c.l.b16 %v500
        %v629 = vunpack.c.l.b16 %v501
        %v630 = vunpack.c.l.b16 %v502
        %v631 = vunpack.c.l.b16 %v503
        %v632 = vunpack.c.l.b16 %v504
        %v633 = vunpack.c.l.b16 %v505
        %v634 = vunpack.c.l.b16 %v506
        %v635 = vunpack.c.l.b16 %v507
        %v636 = vunpack.c.l.b16 %v508
        %v637 = vunpack.c.l.b16 %v509
        %v638 = vunpack.c.l.b16 %v510
        %v639 = vunpack.c.l.b16 %v511
        %v640 = vunpack.c.l.b16 %v512
        %v641 = vunpack.c.l.b16 %v513
        %v642 = vunpack.c.l.b16 %v514
        %v643 = vunpack.c.l.b16 %v515
        %v644 = vunpack.c.l.b16 %v516
        %v645 = vunpack.c.l.b16 %v517
        %v646 = vunpack.c.l.b16 %v518
        %v647 = vunpack.c.l.b16 %v519
        %v648 = vunpack.c.l.b16 %v520
        %v649 = vunpack.c.l.b16 %v521
        %v650 = vunpack.c.l.b16 %v522
        %v651 = vpack.c.b16 %v588, %v587
        %v652 = vpack.c.b16 %v590, %v589
        %v653 = vpack.c.b16 %v592, %v591
        %v654 = vpack.c.b16 %v594, %v593
        %v655 = vpack.c.b16 %v596, %v595
        %v656 = vpack.c.b16 %v598, %v597
        %v657 = vpack.c.b16 %v600, %v599
        %v658 = vpack.c.b16 %v602, %v601
        %v659 = vpack.c.b16 %v604, %v603
        %v660 = vpack.c.b16 %v606, %v605
        %v661 = vpack.c.b16 %v608, %v607
        %v662 = vpack.c.b16 %v610, %v609
        %v663 = vpack.c.b16 %v612, %v611
        %v664 = vpack.c.b16 %v614, %v613
        %v665 = vpack.c.b16 %v616, %v615
        %v666 = vpack.c.b16 %v618, %v617
        %v667 = vpack.c.b16 %v620, %v619
        %v668 = vpack.c.b16 %v622, %v621
        %v669 = vpack.c.b16 %v624, %v623
        %v670 = vpack.c.b16 %v626, %v625
        %v671 = vpack.c.b16 %v628, %v627
        %v672 = vpack.c.b16 %v630, %v629
        %v673 = vpack.c.b16 %v632, %v631
        %v674 = vpack.c.b16 %v634, %v633
        %v675 = vpack.c.b16 %v636, %v635
        %v676 = vpack.c.b16 %v638, %v637
        %v677 = vpack.c.b16 %v640, %v639
        %v678 = vpack.c.b16 %v642, %v641
        %v679 = vpack.c.b16 %v644, %v643
        %v680 = vpack.c.b16 %v646, %v645
        %v681 = vpack.c.b16 %v648, %v647
        %v682 = vpack.c.b16 %v650, %v649
        %715 = vmatprep.subr.bf16.mxu0 0
        %716 = vmatpush1.bf16.msra.mxu0 %v658
        %717 = vmatprep.subr.bf16.mxu0 0
        %718 = vmatpush1.bf16.msra.mxu0 %v657
        %719 = vmatprep.subr.bf16.mxu0 0
        %720 = vmatpush1.bf16.msra.mxu0 %v656
        %721 = vmatprep.subr.bf16.mxu0 0
        %722 = vmatpush1.bf16.msra.mxu0 %v655
        %723 = vmatprep.subr.bf16.mxu0 0
        %724 = vmatpush1.bf16.msra.mxu0 %v654
        %725 = vmatprep.subr.bf16.mxu0 0
        %726 = vmatpush1.bf16.msra.mxu0 %v653
        %727 = vmatprep.subr.bf16.mxu0 0
        %728 = vmatpush1.bf16.msra.mxu0 %v652
        %729 = vmatprep.subr.bf16.mxu0 0
        %730 = vmatpush1.bf16.msra.mxu0 %v651
        %731 = vmatprep.subr.bf16.mxu0 0
        %732 = vmatpush2.bf16.msra.mxu0 %v666
        %733 = vmatprep.subr.bf16.mxu0 0
        %734 = vmatpush2.bf16.msra.mxu0 %v665
        %735 = vmatprep.subr.bf16.mxu0 0
        %736 = vmatpush2.bf16.msra.mxu0 %v664
        %737 = vmatprep.subr.bf16.mxu0 0
        %738 = vmatpush2.bf16.msra.mxu0 %v663
        %739 = vmatprep.subr.bf16.mxu0 0
        %740 = vmatpush2.bf16.msra.mxu0 %v662
        %741 = vmatprep.subr.bf16.mxu0 0
        %742 = vmatpush2.bf16.msra.mxu0 %v661
        %743 = vmatprep.subr.bf16.mxu0 0
        %744 = vmatpush2.bf16.msra.mxu0 %v660
        %745 = vmatprep.subr.bf16.mxu0 0
        %746 = vmatpush2.bf16.msra.mxu0 %v659
        %747 = vmatprep.mubr.bf16.mxu0 %v396
        %748 = vmatmul.mubr.bf16.gmra.mxu0 %v395
        %v749 = vpop.f32.mrf.mxu0
        %v750 = vadd.f32 0.0, %v749
        %v751 = vpop.f32.mrf.mxu0
        %v752 = vpop.f32.mrf.mxu0
        %v753 = vadd.f32 0.0, %v752
        %v754 = vpop.f32.mrf.mxu0
        %755 = vmatprep.mubr.bf16.mxu0 %v400
        %756 = vmatmul.mubr.bf16.gmra.mxu0 %v399
        %v757 = vpop.f32.mrf.mxu0
        %v758 = vadd.f32 0.0, %v757
        %v759 = vpop.f32.mrf.mxu0
        %v760 = vpop.f32.mrf.mxu0
        %v761 = vadd.f32 0.0, %v760
        %v762 = vpop.f32.mrf.mxu0
        %763 = vmatprep.mubr.bf16.mxu0 %v404
        %764 = vmatmul.mubr.bf16.gmra.mxu0 %v403
        %v765 = vpop.f32.mrf.mxu0
        %v766 = vadd.f32 0.0, %v765
        %v767 = vpop.f32.mrf.mxu0
        %v768 = vpop.f32.mrf.mxu0
        %v769 = vadd.f32 0.0, %v768
        %v770 = vpop.f32.mrf.mxu0
        %771 = vmatprep.mubr.bf16.mxu0 %v408
        %772 = vmatmul.mubr.bf16.gmra.mxu0 %v407
        %v773 = vpop.f32.mrf.mxu0
        %v774 = vadd.f32 0.0, %v773
        %v775 = vpop.f32.mrf.mxu0
        %v776 = vpop.f32.mrf.mxu0
        %v777 = vadd.f32 0.0, %v776
        %v778 = vpop.f32.mrf.mxu0
        %779 = vmatprep.mubr.bf16.mxu0 %v412
        %780 = vmatmul.mubr.bf16.gmra.mxu0 %v411
        %v781 = vpop.f32.mrf.mxu0
        %v782 = vadd.f32 0.0, %v781
        %v783 = vpop.f32.mrf.mxu0
        %v784 = vpop.f32.mrf.mxu0
        %v785 = vadd.f32 0.0, %v784
        %v786 = vpop.f32.mrf.mxu0
        %787 = vmatprep.mubr.bf16.mxu0 %v416
        %788 = vmatmul.mubr.bf16.gmra.mxu0 %v415
        %v789 = vpop.f32.mrf.mxu0
        %v790 = vadd.f32 0.0, %v789
        %v791 = vpop.f32.mrf.mxu0
        %v792 = vpop.f32.mrf.mxu0
        %v793 = vadd.f32 0.0, %v792
        %v794 = vpop.f32.mrf.mxu0
        %795 = vmatprep.mubr.bf16.mxu0 %v420
        %796 = vmatmul.mubr.bf16.gmra.mxu0 %v419
        %v797 = vpop.f32.mrf.mxu0
        %v798 = vadd.f32 0.0, %v797
        %v799 = vpop.f32.mrf.mxu0
        %v800 = vpop.f32.mrf.mxu0
        %v801 = vadd.f32 0.0, %v800
        %v802 = vpop.f32.mrf.mxu0
        %803 = vmatprep.mubr.bf16.mxu0 %v424
        %804 = vmatmul.mubr.bf16.gmra.mxu0 %v423
        %v805 = vpop.f32.mrf.mxu0
        %v806 = vadd.f32 0.0, %v805
        %v807 = vpop.f32.mrf.mxu0
        %v808 = vpop.f32.mrf.mxu0
        %v809 = vadd.f32 0.0, %v808
        %v810 = vpop.f32.mrf.mxu0
        %811 = vmatprep.mubr.bf16.mxu0 %v428
        %812 = vmatmul.mubr.bf16.gmra.mxu0 %v427
        %v813 = vpop.f32.mrf.mxu0
        %v814 = vadd.f32 0.0, %v813
        %v815 = vpop.f32.mrf.mxu0
        %v816 = vpop.f32.mrf.mxu0
        %v817 = vadd.f32 0.0, %v816
        %v818 = vpop.f32.mrf.mxu0
        %819 = vmatprep.mubr.bf16.mxu0 %v432
        %820 = vmatmul.mubr.bf16.gmra.mxu0 %v431
        %v821 = vpop.f32.mrf.mxu0
        %v822 = vadd.f32 0.0, %v821
        %v823 = vpop.f32.mrf.mxu0
        %v824 = vpop.f32.mrf.mxu0
        %v825 = vadd.f32 0.0, %v824
        %v826 = vpop.f32.mrf.mxu0
        %827 = vmatprep.mubr.bf16.mxu0 %v436
        %828 = vmatmul.mubr.bf16.gmra.mxu0 %v435
        %v829 = vpop.f32.mrf.mxu0
        %v830 = vadd.f32 0.0, %v829
        %v831 = vpop.f32.mrf.mxu0
        %v832 = vpop.f32.mrf.mxu0
        %v833 = vadd.f32 0.0, %v832
        %v834 = vpop.f32.mrf.mxu0
        %835 = vmatprep.mubr.bf16.mxu0 %v440
        %836 = vmatmul.mubr.bf16.gmra.mxu0 %v439
        %v837 = vpop.f32.mrf.mxu0
        %v838 = vadd.f32 0.0, %v837
        %v839 = vpop.f32.mrf.mxu0
        %v840 = vpop.f32.mrf.mxu0
        %v841 = vadd.f32 0.0, %v840
        %v842 = vpop.f32.mrf.mxu0
        %843 = vmatprep.mubr.bf16.mxu0 %v444
        %844 = vmatmul.mubr.bf16.gmra.mxu0 %v443
        %v845 = vpop.f32.mrf.mxu0
        %v846 = vadd.f32 0.0, %v845
        %v847 = vpop.f32.mrf.mxu0
        %v848 = vpop.f32.mrf.mxu0
        %v849 = vadd.f32 0.0, %v848
        %v850 = vpop.f32.mrf.mxu0
        %851 = vmatprep.mubr.bf16.mxu0 %v448
        %852 = vmatmul.mubr.bf16.gmra.mxu0 %v447
        %v853 = vpop.f32.mrf.mxu0
        %v854 = vadd.f32 0.0, %v853
        %v855 = vpop.f32.mrf.mxu0
        %v856 = vpop.f32.mrf.mxu0
        %v857 = vadd.f32 0.0, %v856
        %v858 = vpop.f32.mrf.mxu0
        %859 = vmatprep.mubr.bf16.mxu0 %v452
        %860 = vmatmul.mubr.bf16.gmra.mxu0 %v451
        %v861 = vpop.f32.mrf.mxu0
        %v862 = vadd.f32 0.0, %v861
        %v863 = vpop.f32.mrf.mxu0
        %v864 = vpop.f32.mrf.mxu0
        %v865 = vadd.f32 0.0, %v864
        %v866 = vpop.f32.mrf.mxu0
        %867 = vmatprep.mubr.bf16.mxu0 %v456
        %868 = vmatmul.mubr.bf16.gmra.mxu0 %v455
        %v869 = vpop.f32.mrf.mxu0
        %v870 = vadd.f32 0.0, %v869
        %v871 = vpop.f32.mrf.mxu0
        %v872 = vpop.f32.mrf.mxu0
        %v873 = vadd.f32 0.0, %v872
        %v874 = vpop.f32.mrf.mxu0
        %875 = vdwg.mxu0
        %876 = vmatprep.subr.bf16.mxu0 0
        %877 = vmatpush1.bf16.msra.mxu0 %v674
        %878 = vmatprep.subr.bf16.mxu0 0
        %879 = vmatpush1.bf16.msra.mxu0 %v673
        %880 = vmatprep.subr.bf16.mxu0 0
        %881 = vmatpush1.bf16.msra.mxu0 %v672
        %882 = vmatprep.subr.bf16.mxu0 0
        %883 = vmatpush1.bf16.msra.mxu0 %v671
        %884 = vmatprep.subr.bf16.mxu0 0
        %885 = vmatpush1.bf16.msra.mxu0 %v670
        %886 = vmatprep.subr.bf16.mxu0 0
        %887 = vmatpush1.bf16.msra.mxu0 %v669
        %888 = vmatprep.subr.bf16.mxu0 0
        %889 = vmatpush1.bf16.msra.mxu0 %v668
        %890 = vmatprep.subr.bf16.mxu0 0
        %891 = vmatpush1.bf16.msra.mxu0 %v667
        %892 = vmatprep.subr.bf16.mxu0 0
        %893 = vmatpush2.bf16.msra.mxu0 %v682
        %894 = vmatprep.subr.bf16.mxu0 0
        %895 = vmatpush2.bf16.msra.mxu0 %v681
        %896 = vmatprep.subr.bf16.mxu0 0
        %897 = vmatpush2.bf16.msra.mxu0 %v680
        %898 = vmatprep.subr.bf16.mxu0 0
        %899 = vmatpush2.bf16.msra.mxu0 %v679
        %900 = vmatprep.subr.bf16.mxu0 0
        %901 = vmatpush2.bf16.msra.mxu0 %v678
        %902 = vmatprep.subr.bf16.mxu0 0
        %903 = vmatpush2.bf16.msra.mxu0 %v677
        %904 = vmatprep.subr.bf16.mxu0 0
        %905 = vmatpush2.bf16.msra.mxu0 %v676
        %906 = vmatprep.subr.bf16.mxu0 0
        %907 = vmatpush2.bf16.msra.mxu0 %v675
        %908 = vmatprep.mubr.bf16.mxu0 %v398
        %909 = vmatmul.mubr.bf16.gmra.mxu0 %v397
        %v910 = vpop.f32.mrf.mxu0
        %v911 = vadd.f32 %v750, %v910
        %v912 = vpop.f32.mrf.mxu0
        %v913 = vpop.f32.mrf.mxu0
        %v914 = vadd.f32 %v753, %v913
        %v915 = vpop.f32.mrf.mxu0
        %916 = vmatprep.mubr.bf16.mxu0 %v402
        %917 = vmatmul.mubr.bf16.gmra.mxu0 %v401
        %v918 = vpop.f32.mrf.mxu0
        %v919 = vadd.f32 %v758, %v918
        %v920 = vpop.f32.mrf.mxu0
        %v921 = vpop.f32.mrf.mxu0
        %v922 = vadd.f32 %v761, %v921
        %v923 = vpop.f32.mrf.mxu0
        %924 = vmatprep.mubr.bf16.mxu0 %v406
        %925 = vmatmul.mubr.bf16.gmra.mxu0 %v405
        %v926 = vpop.f32.mrf.mxu0
        %v927 = vadd.f32 %v766, %v926
        %v928 = vpop.f32.mrf.mxu0
        %v929 = vpop.f32.mrf.mxu0
        %v930 = vadd.f32 %v769, %v929
        %v931 = vpop.f32.mrf.mxu0
        %932 = vmatprep.mubr.bf16.mxu0 %v410
        %933 = vmatmul.mubr.bf16.gmra.mxu0 %v409
        %v934 = vpop.f32.mrf.mxu0
        %v935 = vadd.f32 %v774, %v934
        %v936 = vpop.f32.mrf.mxu0
        %v937 = vpop.f32.mrf.mxu0
        %v938 = vadd.f32 %v777, %v937
        %v939 = vpop.f32.mrf.mxu0
        %940 = vmatprep.mubr.bf16.mxu0 %v414
        %941 = vmatmul.mubr.bf16.gmra.mxu0 %v413
        %v942 = vpop.f32.mrf.mxu0
        %v943 = vadd.f32 %v782, %v942
        %v944 = vpop.f32.mrf.mxu0
        %v945 = vpop.f32.mrf.mxu0
        %v946 = vadd.f32 %v785, %v945
        %v947 = vpop.f32.mrf.mxu0
        %948 = vmatprep.mubr.bf16.mxu0 %v418
        %949 = vmatmul.mubr.bf16.gmra.mxu0 %v417
        %v950 = vpop.f32.mrf.mxu0
        %v951 = vadd.f32 %v790, %v950
        %v952 = vpop.f32.mrf.mxu0
        %v953 = vpop.f32.mrf.mxu0
        %v954 = vadd.f32 %v793, %v953
        %v955 = vpop.f32.mrf.mxu0
        %956 = vmatprep.mubr.bf16.mxu0 %v422
        %957 = vmatmul.mubr.bf16.gmra.mxu0 %v421
        %v958 = vpop.f32.mrf.mxu0
        %v959 = vadd.f32 %v798, %v958
        %v960 = vpop.f32.mrf.mxu0
        %v961 = vpop.f32.mrf.mxu0
        %v962 = vadd.f32 %v801, %v961
        %v963 = vpop.f32.mrf.mxu0
        %964 = vmatprep.mubr.bf16.mxu0 %v426
        %965 = vmatmul.mubr.bf16.gmra.mxu0 %v425
        %v966 = vpop.f32.mrf.mxu0
        %v967 = vadd.f32 %v806, %v966
        %v968 = vpop.f32.mrf.mxu0
        %v969 = vpop.f32.mrf.mxu0
        %v970 = vadd.f32 %v809, %v969
        %v971 = vpop.f32.mrf.mxu0
        %972 = vmatprep.mubr.bf16.mxu0 %v430
        %973 = vmatmul.mubr.bf16.gmra.mxu0 %v429
        %v974 = vpop.f32.mrf.mxu0
        %v975 = vadd.f32 %v814, %v974
        %v976 = vpop.f32.mrf.mxu0
        %v977 = vpop.f32.mrf.mxu0
        %v978 = vadd.f32 %v817, %v977
        %v979 = vpop.f32.mrf.mxu0
        %980 = vmatprep.mubr.bf16.mxu0 %v434
        %981 = vmatmul.mubr.bf16.gmra.mxu0 %v433
        %v982 = vpop.f32.mrf.mxu0
        %v983 = vadd.f32 %v822, %v982
        %v984 = vpop.f32.mrf.mxu0
        %v985 = vpop.f32.mrf.mxu0
        %v986 = vadd.f32 %v825, %v985
        %v987 = vpop.f32.mrf.mxu0
        %988 = vmatprep.mubr.bf16.mxu0 %v438
        %989 = vmatmul.mubr.bf16.gmra.mxu0 %v437
        %v990 = vpop.f32.mrf.mxu0
        %v991 = vadd.f32 %v830, %v990
        %v992 = vpop.f32.mrf.mxu0
        %v993 = vpop.f32.mrf.mxu0
        %v994 = vadd.f32 %v833, %v993
        %v995 = vpop.f32.mrf.mxu0
        %996 = vmatprep.mubr.bf16.mxu0 %v442
        %997 = vmatmul.mubr.bf16.gmra.mxu0 %v441
        %v998 = vpop.f32.mrf.mxu0
        %v999 = vadd.f32 %v838, %v998
        %v1000 = vpop.f32.mrf.mxu0
        %v1001 = vpop.f32.mrf.mxu0
        %v1002 = vadd.f32 %v841, %v1001
        %v1003 = vpop.f32.mrf.mxu0
        %1004 = vmatprep.mubr.bf16.mxu0 %v446
        %1005 = vmatmul.mubr.bf16.gmra.mxu0 %v445
        %v1006 = vpop.f32.mrf.mxu0
        %v1007 = vadd.f32 %v846, %v1006
        %v1008 = vpop.f32.mrf.mxu0
        %v1009 = vpop.f32.mrf.mxu0
        %v1010 = vadd.f32 %v849, %v1009
        %v1011 = vpop.f32.mrf.mxu0
        %1012 = vmatprep.mubr.bf16.mxu0 %v450
        %1013 = vmatmul.mubr.bf16.gmra.mxu0 %v449
        %v1014 = vpop.f32.mrf.mxu0
        %v1015 = vadd.f32 %v854, %v1014
        %v1016 = vpop.f32.mrf.mxu0
        %v1017 = vpop.f32.mrf.mxu0
        %v1018 = vadd.f32 %v857, %v1017
        %v1019 = vpop.f32.mrf.mxu0
        %1020 = vmatprep.mubr.bf16.mxu0 %v454
        %1021 = vmatmul.mubr.bf16.gmra.mxu0 %v453
        %v1022 = vpop.f32.mrf.mxu0
        %v1023 = vadd.f32 %v862, %v1022
        %v1024 = vpop.f32.mrf.mxu0
        %v1025 = vpop.f32.mrf.mxu0
        %v1026 = vadd.f32 %v865, %v1025
        %v1027 = vpop.f32.mrf.mxu0
        %1028 = vmatprep.mubr.bf16.mxu0 %v458
        %1029 = vmatmul.mubr.bf16.gmra.mxu0 %v457
        %v1030 = vpop.f32.mrf.mxu0
        %v1031 = vadd.f32 %v870, %v1030
        %v1032 = vpop.f32.mrf.mxu0
        %v1033 = vpop.f32.mrf.mxu0
        %v1034 = vadd.f32 %v873, %v1033
        %v1035 = vpop.f32.mrf.mxu0
        %1036 = vdwg.mxu0
        %v1037 = vadd.f32 %v235, %v911
        %v1038 = vadd.f32 %v236, %v914
        %v1039 = vadd.f32 %v237, %v919
        %v1040 = vadd.f32 %v238, %v922
        %v1041 = vadd.f32 %v239, %v927
        %v1042 = vadd.f32 %v240, %v930
        %v1043 = vadd.f32 %v241, %v935
        %v1044 = vadd.f32 %v242, %v938
        %v1045 = vadd.f32 %v243, %v943
        %v1046 = vadd.f32 %v244, %v946
        %v1047 = vadd.f32 %v245, %v951
        %v1048 = vadd.f32 %v246, %v954
        %v1049 = vadd.f32 %v247, %v959
        %v1050 = vadd.f32 %v248, %v962
        %v1051 = vadd.f32 %v249, %v967
        %v1052 = vadd.f32 %v250, %v970
        %v1053 = vadd.f32 %v251, %v975
        %v1054 = vadd.f32 %v252, %v978
        %v1055 = vadd.f32 %v253, %v983
        %v1056 = vadd.f32 %v254, %v986
        %v1057 = vadd.f32 %v255, %v991
        %v1058 = vadd.f32 %v256, %v994
        %v1059 = vadd.f32 %v257, %v999
        %v1060 = vadd.f32 %v258, %v1002
        %v1061 = vadd.f32 %v259, %v1007
        %v1062 = vadd.f32 %v260, %v1010
        %v1063 = vadd.f32 %v261, %v1015
        %v1064 = vadd.f32 %v262, %v1018
        %v1065 = vadd.f32 %v263, %v1023
        %v1066 = vadd.f32 %v264, %v1026
        %v1067 = vadd.f32 %v265, %v1031
        %v1068 = vadd.f32 %v266, %v1034
        %1069 = vst [vmem:[#allocation2] sm:$0xff] %v1037
        %1070 = vst [vmem:[#allocation2 + $0x8] sm:$0xff] %v1038
        %1071 = vst [vmem:[#allocation2 + $0x10] sm:$0xff] %v1039
        %1072 = vst [vmem:[#allocation2 + $0x18] sm:$0xff] %v1040
        %1073 = vst [vmem:[#allocation2 + $0x20] sm:$0xff] %v1041
        %1074 = vst [vmem:[#allocation2 + $0x28] sm:$0xff] %v1042
        %1075 = vst [vmem:[#allocation2 + $0x30] sm:$0xff] %v1043
        %1076 = vst [vmem:[#allocation2 + $0x38] sm:$0xff] %v1044
        %1077 = vst [vmem:[#allocation2 + $0x40] sm:$0xff] %v1045
        %1078 = vst [vmem:[#allocation2 + $0x48] sm:$0xff] %v1046
        %1079 = vst [vmem:[#allocation2 + $0x50] sm:$0xff] %v1047
        %1080 = vst [vmem:[#allocation2 + $0x58] sm:$0xff] %v1048
        %1081 = vst [vmem:[#allocation2 + $0x60] sm:$0xff] %v1049
        %1082 = vst [vmem:[#allocation2 + $0x68] sm:$0xff] %v1050
        %1083 = vst [vmem:[#allocation2 + $0x70] sm:$0xff] %v1051
        %1084 = vst [vmem:[#allocation2 + $0x78] sm:$0xff] %v1052
        %1085 = vst [vmem:[#allocation2 + $0x80] sm:$0xff] %v1053
        %1086 = vst [vmem:[#allocation2 + $0x88] sm:$0xff] %v1054
        %1087 = vst [vmem:[#allocation2 + $0x90] sm:$0xff] %v1055
        %1088 = vst [vmem:[#allocation2 + $0x98] sm:$0xff] %v1056
        %1089 = vst [vmem:[#allocation2 + $0xa0] sm:$0xff] %v1057
        %1090 = vst [vmem:[#allocation2 + $0xa8] sm:$0xff] %v1058
        %1091 = vst [vmem:[#allocation2 + $0xb0] sm:$0xff] %v1059
        %1092 = vst [vmem:[#allocation2 + $0xb8] sm:$0xff] %v1060
        %1093 = vst [vmem:[#allocation2 + $0xc0] sm:$0xff] %v1061
        %1094 = vst [vmem:[#allocation2 + $0xc8] sm:$0xff] %v1062
        %1095 = vst [vmem:[#allocation2 + $0xd0] sm:$0xff] %v1063
        %1096 = vst [vmem:[#allocation2 + $0xd8] sm:$0xff] %v1064
        %1097 = vst [vmem:[#allocation2 + $0xe0] sm:$0xff] %v1065
        %1098 = vst [vmem:[#allocation2 + $0xe8] sm:$0xff] %v1066
        %1099 = vst [vmem:[#allocation2 + $0xf0] sm:$0xff] %v1067
        %1100 = vst [vmem:[#allocation2 + $0xf8] sm:$0xff] %v1068
        // Predicated region
        $region33: #{gunpool_block_forward.5} parent=27 // pred_check
          %p1101 = pneg %p199
        $region34: #{gunpool_block_forward.5} parent=27 // pred_check_branch
          %1103 = sbr.rel (%p1101) target = $region36
        $region35: #{gunpool_block_forward.5} parent=27 // pred_region
          %v1104 = vld [vmem:[#allocation2] sm:$0xff]
          %v1105 = vld [vmem:[#allocation2 + $0x8] sm:$0xff]
          %v1106 = vld [vmem:[#allocation2 + $0x10] sm:$0xff]
          %v1107 = vld [vmem:[#allocation2 + $0x18] sm:$0xff]
          %v1108 = vld [vmem:[#allocation2 + $0x20] sm:$0xff]
          %v1109 = vld [vmem:[#allocation2 + $0x28] sm:$0xff]
          %v1110 = vld [vmem:[#allocation2 + $0x30] sm:$0xff]
          %v1111 = vld [vmem:[#allocation2 + $0x38] sm:$0xff]
          %v1112 = vld [vmem:[#allocation2 + $0x40] sm:$0xff]
          %v1113 = vld [vmem:[#allocation2 + $0x48] sm:$0xff]
          %v1114 = vld [vmem:[#allocation2 + $0x50] sm:$0xff]
          %v1115 = vld [vmem:[#allocation2 + $0x58] sm:$0xff]
          %v1116 = vld [vmem:[#allocation2 + $0x60] sm:$0xff]
          %v1117 = vld [vmem:[#allocation2 + $0x68] sm:$0xff]
          %v1118 = vld [vmem:[#allocation2 + $0x70] sm:$0xff]
          %v1119 = vld [vmem:[#allocation2 + $0x78] sm:$0xff]
          %v1120 = vld [vmem:[#allocation2 + $0x80] sm:$0xff]
          %v1121 = vld [vmem:[#allocation2 + $0x88] sm:$0xff]
          %v1122 = vld [vmem:[#allocation2 + $0x90] sm:$0xff]
          %v1123 = vld [vmem:[#allocation2 + $0x98] sm:$0xff]
          %v1124 = vld [vmem:[#allocation2 + $0xa0] sm:$0xff]
          %v1125 = vld [vmem:[#allocation2 + $0xa8] sm:$0xff]
          %v1126 = vld [vmem:[#allocation2 + $0xb0] sm:$0xff]
          %v1127 = vld [vmem:[#allocation2 + $0xb8] sm:$0xff]
          %v1128 = vld [vmem:[#allocation2 + $0xc0] sm:$0xff]
          %v1129 = vld [vmem:[#allocation2 + $0xc8] sm:$0xff]
          %v1130 = vld [vmem:[#allocation2 + $0xd0] sm:$0xff]
          %v1131 = vld [vmem:[#allocation2 + $0xd8] sm:$0xff]
          %v1132 = vld [vmem:[#allocation2 + $0xe0] sm:$0xff]
          %v1133 = vld [vmem:[#allocation2 + $0xe8] sm:$0xff]
          %v1134 = vld [vmem:[#allocation2 + $0xf0] sm:$0xff]
          %v1135 = vld [vmem:[#allocation2 + $0xf8] sm:$0xff]
          %v1136 = vmax.f32 %v1104, 0.0
          %v1137 = vmax.f32 %v1105, 0.0
          %v1138 = vmax.f32 %v1106, 0.0
          %v1139 = vmax.f32 %v1107, 0.0
          %v1140 = vmax.f32 %v1108, 0.0
          %v1141 = vmax.f32 %v1109, 0.0
          %v1142 = vmax.f32 %v1110, 0.0
          %v1143 = vmax.f32 %v1111, 0.0
          %v1144 = vmax.f32 %v1112, 0.0
          %v1145 = vmax.f32 %v1113, 0.0
          %v1146 = vmax.f32 %v1114, 0.0
          %v1147 = vmax.f32 %v1115, 0.0
          %v1148 = vmax.f32 %v1116, 0.0
          %v1149 = vmax.f32 %v1117, 0.0
          %v1150 = vmax.f32 %v1118, 0.0
          %v1151 = vmax.f32 %v1119, 0.0
          %v1152 = vmax.f32 %v1120, 0.0
          %v1153 = vmax.f32 %v1121, 0.0
          %v1154 = vmax.f32 %v1122, 0.0
          %v1155 = vmax.f32 %v1123, 0.0
          %v1156 = vmax.f32 %v1124, 0.0
          %v1157 = vmax.f32 %v1125, 0.0
          %v1158 = vmax.f32 %v1126, 0.0
          %v1159 = vmax.f32 %v1127, 0.0
          %v1160 = vmax.f32 %v1128, 0.0
          %v1161 = vmax.f32 %v1129, 0.0
          %v1162 = vmax.f32 %v1130, 0.0
          %v1163 = vmax.f32 %v1131, 0.0
          %v1164 = vmax.f32 %v1132, 0.0
          %v1165 = vmax.f32 %v1133, 0.0
          %v1166 = vmax.f32 %v1134, 0.0
          %v1167 = vmax.f32 %v1135, 0.0
          %1168 = vst [vmem:[%s178] sm:$0xff] %v1136
          %1169 = vst [vmem:[%s178 + $0x8] sm:$0xff] %v1137
          %1170 = vst [vmem:[%s178 + $0x10] sm:$0xff] %v1138
          %1171 = vst [vmem:[%s178 + $0x18] sm:$0xff] %v1139
          %1172 = vst [vmem:[%s178 + $0x20] sm:$0xff] %v1140
          %1173 = vst [vmem:[%s178 + $0x28] sm:$0xff] %v1141
          %1174 = vst [vmem:[%s178 + $0x30] sm:$0xff] %v1142
          %1175 = vst [vmem:[%s178 + $0x38] sm:$0xff] %v1143
          %1176 = vst [vmem:[%s178 + $0x40] sm:$0xff] %v1144
          %1177 = vst [vmem:[%s178 + $0x48] sm:$0xff] %v1145
          %1178 = vst [vmem:[%s178 + $0x50] sm:$0xff] %v1146
          %1179 = vst [vmem:[%s178 + $0x58] sm:$0xff] %v1147
          %1180 = vst [vmem:[%s178 + $0x60] sm:$0xff] %v1148
          %1181 = vst [vmem:[%s178 + $0x68] sm:$0xff] %v1149
          %1182 = vst [vmem:[%s178 + $0x70] sm:$0xff] %v1150
          %1183 = vst [vmem:[%s178 + $0x78] sm:$0xff] %v1151
          %1184 = vst [vmem:[%s178 + $0x80] sm:$0xff] %v1152
          %1185 = vst [vmem:[%s178 + $0x88] sm:$0xff] %v1153
          %1186 = vst [vmem:[%s178 + $0x90] sm:$0xff] %v1154
          %1187 = vst [vmem:[%s178 + $0x98] sm:$0xff] %v1155
          %1188 = vst [vmem:[%s178 + $0xa0] sm:$0xff] %v1156
          %1189 = vst [vmem:[%s178 + $0xa8] sm:$0xff] %v1157
          %1190 = vst [vmem:[%s178 + $0xb0] sm:$0xff] %v1158
          %1191 = vst [vmem:[%s178 + $0xb8] sm:$0xff] %v1159
          %1192 = vst [vmem:[%s178 + $0xc0] sm:$0xff] %v1160
          %1193 = vst [vmem:[%s178 + $0xc8] sm:$0xff] %v1161
          %1194 = vst [vmem:[%s178 + $0xd0] sm:$0xff] %v1162
          %1195 = vst [vmem:[%s178 + $0xd8] sm:$0xff] %v1163
          %1196 = vst [vmem:[%s178 + $0xe0] sm:$0xff] %v1164
          %1197 = vst [vmem:[%s178 + $0xe8] sm:$0xff] %v1165
          %1198 = vst [vmem:[%s178 + $0xf0] sm:$0xff] %v1166
          %1199 = vst [vmem:[%s178 + $0xf8] sm:$0xff] %v1167
        $region36: #{gunpool_block_forward.5} parent=27 // pred_fallthru
          _
        %s1200 = sand.u32 %s90, 1
        %s1201 = scalar_lea.sflag [#allocation4], %s1200
        %s1202 = sand.u32 %s90, 1
        %s1203 = smul.addr %s1202, 256
        %s1204 = scalar_lea.vmem [#allocation3], %s1203
        // Predicated region
        $region37: #{gunpool_block_forward.5} parent=27 // pred_check
          %p1205 = pneg %p100
        $region38: #{gunpool_block_forward.5} parent=27 // pred_check_branch
          %1207 = sbr.rel (%p1205) target = $region40
        $region39: #{gunpool_block_forward.5} parent=27 // pred_region
          %s1208 = smul.u32 32, %s20
          %s1210 = ssub.s32 4096, 4096
          %1211 = vsyncadd %s1201, %s1210
          %s1212 = smul.addr %s1208, 128
          %s1213 = scalar_lea.hbm %s2, %s1212
          %s1214 = sshll.u32 %s1204, 4
          %s1215 = int_to_ptr.vmem [resolvable:$true] %s1214
          %1220 = dma.vmem_to_hbm [thread:$0]  %s1215, 4096, %s1213, %s1201, 128, 128, 8
        $region40: #{gunpool_block_forward.5} parent=27 // pred_fallthru
          _
      $region28: #{gunpool_block_forward.5} parent=5 // pred_fallthru
        _
      %p1221 = scmp.le.s32.totalorder 2, %s11
      // Predicated region
      $region41: #{gunpool_block_forward.5} parent=5 // pred_check
        %p1222 = pneg %p1221
      $region42: #{gunpool_block_forward.5} parent=5 // pred_check_branch
        %1224 = sbr.rel (%p1222) target = $region44
      $region43: #{gunpool_block_forward.5} parent=5 // pred_region
        %s1225 = ssub.s32 %s11, 2
        // Predicated region
        $region45: #{gunpool_block_forward.5} parent=43 // pred_check
          %p1226 = pneg %p106
        $region46: #{gunpool_block_forward.5} parent=43 // pred_check_branch
          %1228 = sbr.rel (%p1226) target = $region48
        $region47: #{gunpool_block_forward.5} parent=43 // pred_region
          %s1229 = sand.u32 %s91, 1
          %s1230 = scalar_lea.sflag [#allocation4], %s1229
          %s1231 = sand.u32 %s91, 1
          %s1232 = smul.addr %s1231, 256
          %s1233 = scalar_lea.vmem [#allocation3], %s1232
          %1234 = dma.done %s1230, 4096
        $region48: #{gunpool_block_forward.5} parent=43 // pred_fallthru
          _
      $region44: #{gunpool_block_forward.5} parent=5 // pred_fallthru
        _
    $region6: #{gunpool_block_forward.5} parent=1 // loop_footer
      %s15 = sadd.s32 1, %s11
    $region7: #{gunpool_block_forward.5} parent=1 // loop_footer_branch
      %10 = sbr.rel target = $region3
    $region8: #{gunpool_block_forward.5} parent=1 // loop_exit
      _
    %1235 = vsyncpa [#allocation4], 1
    %s1236 = scalar_lea.sflag [#allocation4], 1
    %1237 = vsyncpa %s1236, 1

</llo_original>
